<compile_context>
chip_gen: v5e
topology: v5e:2x2
jax: 0.10.0
libtpu: 0.0.40
codegen_flags: <defaults>
</compile_context>

<pallas_src>
import functools
import math

import numpy as np
import jax
import jax.numpy as jnp
from jax.experimental import pallas as pl
from jax.experimental.pallas import tpu as pltpu

NUM_GROUPS = 8   # DynamicConv2d(num_groups=8)
KSIZE = 3        # DynamicConv2d(kernel_size=3)


# ---------------------------------------------------------------------------
# Host-side constant tables (pure layout / index math, built once per shape).
# ---------------------------------------------------------------------------
def _pool_matrix(H, W, K=KSIZE):
    """(K*K, H*W): row k = adaptive-avg-pool bucket weights (1/count inside bucket)."""
    P = np.zeros((K * K, H * W), np.float32)
    for i in range(K):
        hs, he = (i * H) // K, -(-((i + 1) * H) // K)
        for j in range(K):
            ws, we = (j * W) // K, -(-((j + 1) * W) // K)
            cnt = float((he - hs) * (we - ws))
            for h in range(hs, he):
                P[i * K + j, h * W + ws: h * W + we] = 1.0 / cnt
    return jnp.asarray(P)


def _col_masks(H, W):
    """(3, H*W) 0/1 masks: row (dx+1) marks valid positions for a horizontal tap shift dx."""
    M = np.ones((3, H * W), np.float32)
    w = np.arange(H * W) % W
    M[0, w == 0] = 0.0          # dx = -1 invalid at w == 0
    M[2, w == W - 1] = 0.0      # dx = +1 invalid at w == W-1
    return jnp.asarray(M)


# ---------------------------------------------------------------------------
# Fused kernel: (1, C, H*W) block -> (1, 1, H*W) block, everything per sample.
# ---------------------------------------------------------------------------
def _softmax_lanes(x):
    x = x - jnp.max(x, axis=-1, keepdims=True)
    e = jnp.exp(x)
    return e / jnp.sum(e, axis=-1, keepdims=True)


def _spatial_attention_kernel(x_ref, sc_ref, p2w_ref, p2b_ref, dynw_ref, dynb_ref,
                              pool_ref, cmask_ref, o_ref, pad_ref, *, W, LP):
    C = x_ref.shape[1]
    HW = x_ref.shape[2]

    # ---- single-pass channel sum + max  (feat = [mean, max], (2, HW)) -------
    xv = x_ref[0]                               # (C, HW), single VMEM load
    s = xv[0:1, :]
    m = xv[0:1, :]
    for c in range(1, C):
        row = xv[c:c + 1, :]
        s = s + row
        m = jnp.maximum(m, row)
    feat = jnp.concatenate([s * (1.0 / C), m], axis=0).astype(jnp.float32)

    # ---- stage feat into a zero-padded (flattened) VMEM scratch --------------
    pad_ref[...] = jnp.zeros_like(pad_ref)
    pad_ref[:, LP:LP + HW] = feat               # lane-aligned window store

    # ---- small parameter tables ----------------------------------------------
    w00 = sc_ref[0]
    w01 = sc_ref[1]
    pb0 = sc_ref[2]
    c1w = (sc_ref[3], sc_ref[4])                # conv1 (1x1, 2->1) weights

    p2w = p2w_ref[...]      # (2, G)   proj2 weight, [c, g]
    p2b = p2b_ref[...]      # (2, G)
    dynw = dynw_ref[...]    # (2*9, G) dynamic depthwise weight table, row c*9+k
    dynb = dynb_ref[...]    # (2, G)
    pool = pool_ref[...]    # (9, HW)  adaptive-pool bucket weights
    cmask = cmask_ref[...]  # (3, HW)  column-validity masks for dx in {-1,0,1}

    def group_mix(y1, c, table_row):
        # y1: (1,1) proj1 output; softmax over groups of proj2(y1), mixed with table_row.
        logits = p2w[c:c + 1, :] * y1 + p2b[c:c + 1, :]      # (1, G)
        sm = _softmax_lanes(logits)
        return jnp.sum(sm * table_row, axis=-1, keepdims=True)   # (1, 1)

    # ---- dynamic bias, conv1-folded ------------------------------------------
    gmean = jnp.mean(feat, axis=-1, keepdims=True)                 # (2, 1)
    y1b = w00 * gmean[0:1, :] + w01 * gmean[1:2, :] + pb0          # (1, 1)
    fb = (c1w[0] * group_mix(y1b, 0, dynb[0:1, :])
          + c1w[1] * group_mix(y1b, 1, dynb[1:2, :]))              # (1, 1)

    # ---- 9-tap dynamic depthwise conv with conv1 folded into the tap weights --
    acc = jnp.zeros((1, HW), jnp.float32) + fb
    for k in range(KSIZE * KSIZE):
        dy = k // KSIZE - 1
        dx = k % KSIZE - 1
        # dynamic weight at tap position k (group softmax is independent per tap)
        pooled = jnp.sum(feat * pool[k:k + 1, :], axis=-1, keepdims=True)   # (2, 1)
        y1 = w00 * pooled[0:1, :] + w01 * pooled[1:2, :] + pb0              # (1, 1)
        # shifted tap planes: rows handled by the zero padding, columns by mask
        start = LP + dy * W + dx
        tap = pad_ref[:, start:start + HW]                                  # (2, HW)
        if dx != 0:
            tap = tap * cmask[dx + 1:dx + 2, :]
        for c in range(2):
            fw = c1w[c] * group_mix(y1, c, dynw[c * 9 + k:c * 9 + k + 1, :])  # (1, 1)
            acc = acc + fw * tap[c:c + 1, :]

    z = acc
    o_ref[0, :, :] = (z * jax.nn.sigmoid(z)).astype(o_ref.dtype)


# ---------------------------------------------------------------------------
# Wrapper: parameter packing (pure layout) + single pallas_call.
# ---------------------------------------------------------------------------
@jax.jit
def spatial_attention(x, p):
    B, C, H, W = x.shape
    HW = H * W
    LP = ((W + 1 + 127) // 128) * 128           # lane-aligned halo pad (>= W+1)

    scalars = jnp.concatenate([
        p['proj1_w'].reshape(-1),               # w00, w01
        p['proj1_b'].reshape(-1),               # b0
        p['conv1_w'].reshape(-1),               # conv1 weights (2)
    ]).astype(jnp.float32)                      # (5,)

    p2w = p['proj2_w'].reshape(NUM_GROUPS, 2).T.astype(jnp.float32)          # (2, G)
    p2b = p['proj2_b'].reshape(NUM_GROUPS, 2).T.astype(jnp.float32)          # (2, G)
    dynw = jnp.transpose(p['dyn_weight'], (1, 2, 3, 0)).reshape(
        2 * KSIZE * KSIZE, NUM_GROUPS).astype(jnp.float32)                   # (18, G)
    dynb = p['dyn_bias'].T.astype(jnp.float32)                               # (2, G)
    pool = _pool_matrix(H, W)                                                # (9, HW)
    cmask = _col_masks(H, W)                                                 # (3, HW)

    kernel = functools.partial(_spatial_attention_kernel, W=W, LP=LP)
    out = pl.pallas_call(
        kernel,
        out_shape=jax.ShapeDtypeStruct((B, 1, HW), jnp.float32),
        grid=(B,),
        in_specs=[
            pl.BlockSpec((1, C, HW), lambda b: (b, 0, 0)),
            pl.BlockSpec(memory_space=pltpu.MemorySpace.SMEM),
            pl.BlockSpec((2, NUM_GROUPS), lambda b: (0, 0)),
            pl.BlockSpec((2, NUM_GROUPS), lambda b: (0, 0)),
            pl.BlockSpec((2 * KSIZE * KSIZE, NUM_GROUPS), lambda b: (0, 0)),
            pl.BlockSpec((2, NUM_GROUPS), lambda b: (0, 0)),
            pl.BlockSpec((KSIZE * KSIZE, HW), lambda b: (0, 0)),
            pl.BlockSpec((3, HW), lambda b: (0, 0)),
        ],
        out_specs=pl.BlockSpec((1, 1, HW), lambda b: (b, 0, 0)),
        scratch_shapes=[pltpu.VMEM((2, HW + 2 * LP), jnp.float32)],
        compiler_params=pltpu.CompilerParams(dimension_semantics=("parallel",)),
    )(x.reshape(B, C, HW).astype(jnp.float32),
      scalars, p2w, p2b, dynw, dynb, pool, cmask)
    return out.reshape(B, 1, H, W).astype(x.dtype)


# ---------------------------------------------------------------------------
# Pure-JAX reference (independent path) for correctness checking.
# ---------------------------------------------------------------------------
def _adaptive_avg_pool2d(x, out_hw):
    B, C, H, W = x.shape
    oh, ow = out_hw
    rows = []
    for i in range(oh):
        hs, he = (i * H) // oh, -(-((i + 1) * H) // oh)
        cols = []
        for j in range(ow):
            ws, we = (j * W) // ow, -(-((j + 1) * W) // ow)
            cols.append(jnp.mean(x[:, :, hs:he, ws:we], axis=(2, 3)))
        rows.append(jnp.stack(cols, axis=-1))
    return jnp.stack(rows, axis=-2)


def _proj(x, p):
    y = jnp.einsum('oc,bchw->bohw', p['proj1_w'][:, :, 0, 0], x) + p['proj1_b'][None, :, None, None]
    y = jnp.einsum('oc,bchw->bohw', p['proj2_w'][:, :, 0, 0], y) + p['proj2_b'][None, :, None, None]
    return y


def _dynamic_filters(feat, p):
    B = feat.shape[0]
    pooled = _adaptive_avg_pool2d(feat, (KSIZE, KSIZE))
    scale = jax.nn.softmax(_proj(pooled, p).reshape(B, NUM_GROUPS, 2, KSIZE, KSIZE), axis=1)
    dyn_w = jnp.sum(scale * p['dyn_weight'][None], axis=1)
    gmean = jnp.mean(feat, axis=(2, 3), keepdims=True)
    sb = jax.nn.softmax(_proj(gmean, p).reshape(B, NUM_GROUPS, 2), axis=1)
    dyn_b = jnp.sum(sb * p['dyn_bias'][None], axis=1)
    return dyn_w, dyn_b


def _reference(x, p):
    avg = jnp.mean(x, axis=1, keepdims=True)
    mx = jnp.max(x, axis=1, keepdims=True)
    feat = jnp.concatenate([avg, mx], axis=1)
    dyn_w, dyn_b = _dynamic_filters(feat, p)
    B, _, H, W = feat.shape
    y = jax.lax.conv_general_dilated(
        feat.reshape(1, B * 2, H, W),
        dyn_w.reshape(B * 2, 1, KSIZE, KSIZE),
        window_strides=(1, 1), padding=((1, 1), (1, 1)),
        dimension_numbers=('NCHW', 'OIHW', 'NCHW'),
        feature_group_count=B * 2)
    y = (y + dyn_b.reshape(1, B * 2, 1, 1)).reshape(B, 2, H, W)
    z = jnp.einsum('oc,bchw->bohw', p['conv1_w'][:, :, 0, 0], y)
    return z * jax.nn.sigmoid(z)


def init_params(key):
    ks = jax.random.split(key, 7)

    def u(k, shape, fan_in):
        bound = 1.0 / math.sqrt(fan_in)
        return jax.random.uniform(k, shape, jnp.float32, -bound, bound)

    return {
        'dyn_weight': 0.02 * jax.random.truncated_normal(
            ks[0], -2.0, 2.0, (NUM_GROUPS, 2, KSIZE, KSIZE), jnp.float32),
        'dyn_bias': 0.02 * jax.random.truncated_normal(
            ks[1], -2.0, 2.0, (NUM_GROUPS, 2), jnp.float32),
        'proj1_w': u(ks[2], (1, 2, 1, 1), 2),               # Conv2d(2 -> 1, 1x1)
        'proj1_b': u(ks[3], (1,), 2),
        'proj2_w': u(ks[4], (NUM_GROUPS * 2, 1, 1, 1), 1),  # Conv2d(1 -> 16, 1x1)
        'proj2_b': u(ks[5], (NUM_GROUPS * 2,), 1),
        'conv1_w': u(ks[6], (1, 2, 1, 1), 2),               # Conv2d(2 -> 1, 1x1, bias=False)
    }


if __name__ == "__main__":
    key = jax.random.PRNGKey(0)
    kx, kp = jax.random.split(key)
    x = jax.random.normal(kx, (2, 4, 16, 16), jnp.float32)   # (B, C, H, W)
    params = init_params(kp)

    out = jax.block_until_ready(spatial_attention(x, params))
    ref = jax.block_until_ready(_reference(x, params))

    assert out.shape == (2, 1, 16, 16), out.shape
    assert jnp.allclose(out, ref, atol=1e-5, rtol=1e-5), float(jnp.max(jnp.abs(out - ref)))
    print("KERNEL_OK")
</pallas_src>

<mosaic_0001>
module attributes {stable_mosaic.version = 11 : i64} {
  func.func @_spatial_attention_kernel(%arg0: i32, %arg1: memref<1x4x256xf32, #tpu.memory_space<vmem>>, %arg2: memref<5xf32, #tpu.memory_space<smem>>, %arg3: memref<2x8xf32, #tpu.memory_space<vmem>>, %arg4: memref<2x8xf32, #tpu.memory_space<vmem>>, %arg5: memref<18x8xf32, #tpu.memory_space<vmem>>, %arg6: memref<2x8xf32, #tpu.memory_space<vmem>>, %arg7: memref<9x256xf32, #tpu.memory_space<vmem>>, %arg8: memref<3x256xf32, #tpu.memory_space<vmem>>, %arg9: memref<1x1x256xf32, #tpu.memory_space<vmem>>, %arg10: memref<2x512xf32, #tpu.memory_space<vmem>>) attributes {dimension_semantics = [#tpu.dimension_semantics<parallel>], iteration_bounds = array<i64: 2>, scalar_prefetch = 0 : i64, scratch_operands = 1 : i64, tpu.core_type = #tpu.core_type<tc>, window_params = [{transform_indices = @transform_0, window_bounds = array<i64: 1, 4, 256>}, {transform_indices = @transform_1, window_bounds = array<i64: 5>}, {pipeline_mode = #tpu.pipeline_mode<synchronous>, transform_indices = @transform_2, window_bounds = array<i64: 2, 8>}, {pipeline_mode = #tpu.pipeline_mode<synchronous>, transform_indices = @transform_3, window_bounds = array<i64: 2, 8>}, {pipeline_mode = #tpu.pipeline_mode<synchronous>, transform_indices = @transform_4, window_bounds = array<i64: 18, 8>}, {pipeline_mode = #tpu.pipeline_mode<synchronous>, transform_indices = @transform_5, window_bounds = array<i64: 2, 8>}, {pipeline_mode = #tpu.pipeline_mode<synchronous>, transform_indices = @transform_6, window_bounds = array<i64: 9, 256>}, {pipeline_mode = #tpu.pipeline_mode<synchronous>, transform_indices = @transform_7, window_bounds = array<i64: 3, 256>}, {transform_indices = @transform_8, window_bounds = array<i64: 1, 1, 256>}]} {
    %c0 = arith.constant 0 : index
    %c0_0 = arith.constant 0 : index
    %c0_1 = arith.constant 0 : index
    %0 = vector.load %arg1[%c0, %c0_0, %c0_1] : memref<1x4x256xf32, #tpu.memory_space<vmem>>, vector<1x4x256xf32>
    %1 = vector.shape_cast %0 : vector<1x4x256xf32> to vector<4x256xf32>
    %2 = vector.extract_strided_slice %1 {offsets = [0, 0], sizes = [1, 256], strides = [1, 1]} : vector<4x256xf32> to vector<1x256xf32>
    %3 = vector.extract_strided_slice %1 {offsets = [0, 0], sizes = [1, 256], strides = [1, 1]} : vector<4x256xf32> to vector<1x256xf32>
    %4 = vector.extract_strided_slice %1 {offsets = [1, 0], sizes = [1, 256], strides = [1, 1]} : vector<4x256xf32> to vector<1x256xf32>
    %5 = arith.addf %2, %4 : vector<1x256xf32>
    %6 = arith.maximumf %3, %4 : vector<1x256xf32>
    %7 = vector.extract_strided_slice %1 {offsets = [2, 0], sizes = [1, 256], strides = [1, 1]} : vector<4x256xf32> to vector<1x256xf32>
    %8 = arith.addf %5, %7 : vector<1x256xf32>
    %9 = arith.maximumf %6, %7 : vector<1x256xf32>
    %10 = vector.extract_strided_slice %1 {offsets = [3, 0], sizes = [1, 256], strides = [1, 1]} : vector<4x256xf32> to vector<1x256xf32>
    %11 = arith.addf %8, %10 : vector<1x256xf32>
    %12 = arith.maximumf %9, %10 : vector<1x256xf32>
    %cst = arith.constant 2.500000e-01 : f32
    %13 = vector.broadcast %cst : f32 to vector<1x256xf32>
    %14 = arith.mulf %11, %13 : vector<1x256xf32>
    %15 = tpu.concatenate %14, %12 in 0 : vector<1x256xf32>, vector<1x256xf32> -> vector<2x256xf32>
    %cst_2 = arith.constant 0.000000e+00 : f32
    %16 = vector.broadcast %cst_2 : f32 to vector<2x512xf32>
    %c0_3 = arith.constant 0 : index
    %c0_4 = arith.constant 0 : index
    %17 = vector.load %arg10[%c0_3, %c0_4] : memref<2x512xf32, #tpu.memory_space<vmem>>, vector<2x512xf32>
    tpu.vector_store %arg10[%c0_3, %c0_4], %16 {strides = array<i32>} : memref<2x512xf32, #tpu.memory_space<vmem>>, vector<2x512xf32>,
    %c0_5 = arith.constant 0 : index
    %c128 = arith.constant 128 : index
    %18 = vector.load %arg10[%c0_5, %c128] : memref<2x512xf32, #tpu.memory_space<vmem>>, vector<2x256xf32>
    tpu.vector_store %arg10[%c0_5, %c128], %15 {strides = array<i32>} : memref<2x512xf32, #tpu.memory_space<vmem>>, vector<2x256xf32>,
    %c0_6 = arith.constant 0 : index
    %19 = memref.load %arg2[%c0_6] : memref<5xf32, #tpu.memory_space<smem>>
    %c1 = arith.constant 1 : index
    %20 = memref.load %arg2[%c1] : memref<5xf32, #tpu.memory_space<smem>>
    %c2 = arith.constant 2 : index
    %21 = memref.load %arg2[%c2] : memref<5xf32, #tpu.memory_space<smem>>
    %c3 = arith.constant 3 : index
    %22 = memref.load %arg2[%c3] : memref<5xf32, #tpu.memory_space<smem>>
    %c4 = arith.constant 4 : index
    %23 = memref.load %arg2[%c4] : memref<5xf32, #tpu.memory_space<smem>>
    %c0_7 = arith.constant 0 : index
    %c0_8 = arith.constant 0 : index
    %24 = vector.load %arg3[%c0_7, %c0_8] : memref<2x8xf32, #tpu.memory_space<vmem>>, vector<2x8xf32>
    %c0_9 = arith.constant 0 : index
    %c0_10 = arith.constant 0 : index
    %25 = vector.load %arg4[%c0_9, %c0_10] : memref<2x8xf32, #tpu.memory_space<vmem>>, vector<2x8xf32>
    %c0_11 = arith.constant 0 : index
    %c0_12 = arith.constant 0 : index
    %26 = vector.load %arg5[%c0_11, %c0_12] : memref<18x8xf32, #tpu.memory_space<vmem>>, vector<18x8xf32>
    %c0_13 = arith.constant 0 : index
    %c0_14 = arith.constant 0 : index
    %27 = vector.load %arg6[%c0_13, %c0_14] : memref<2x8xf32, #tpu.memory_space<vmem>>, vector<2x8xf32>
    %c0_15 = arith.constant 0 : index
    %c0_16 = arith.constant 0 : index
    %28 = vector.load %arg7[%c0_15, %c0_16] : memref<9x256xf32, #tpu.memory_space<vmem>>, vector<9x256xf32>
    %c0_17 = arith.constant 0 : index
    %c0_18 = arith.constant 0 : index
    %29 = vector.load %arg8[%c0_17, %c0_18] : memref<3x256xf32, #tpu.memory_space<vmem>>, vector<3x256xf32>
    %cst_19 = arith.constant dense<0.000000e+00> : vector<2xf32>
    %30 = vector.multi_reduction <add>, %15, %cst_19 [1] : vector<2x256xf32> to vector<2xf32>
    %31 = vector.shape_cast %30 : vector<2xf32> to vector<2x1xf32>
    %cst_20 = arith.constant 2.560000e+02 : f32
    %32 = vector.broadcast %cst_20 : f32 to vector<2x1xf32>
    %33 = arith.divf %31, %32 : vector<2x1xf32>
    %34 = vector.extract_strided_slice %33 {offsets = [0, 0], sizes = [1, 1], strides = [1, 1]} : vector<2x1xf32> to vector<1x1xf32>
    %35 = vector.broadcast %19 : f32 to vector<1x1xf32>
    %36 = arith.mulf %35, %34 : vector<1x1xf32>
    %37 = vector.extract_strided_slice %33 {offsets = [1, 0], sizes = [1, 1], strides = [1, 1]} : vector<2x1xf32> to vector<1x1xf32>
    %38 = vector.broadcast %20 : f32 to vector<1x1xf32>
    %39 = arith.mulf %38, %37 : vector<1x1xf32>
    %40 = arith.addf %36, %39 : vector<1x1xf32>
    %41 = vector.broadcast %21 : f32 to vector<1x1xf32>
    %42 = arith.addf %40, %41 : vector<1x1xf32>
    %43 = vector.extract_strided_slice %27 {offsets = [0, 0], sizes = [1, 8], strides = [1, 1]} : vector<2x8xf32> to vector<1x8xf32>
    %44 = vector.extract_strided_slice %24 {offsets = [0, 0], sizes = [1, 8], strides = [1, 1]} : vector<2x8xf32> to vector<1x8xf32>
    %45 = vector.broadcast %42 : vector<1x1xf32> to vector<1x8xf32>
    %46 = arith.mulf %44, %45 : vector<1x8xf32>
    %47 = vector.extract_strided_slice %25 {offsets = [0, 0], sizes = [1, 8], strides = [1, 1]} : vector<2x8xf32> to vector<1x8xf32>
    %48 = arith.addf %46, %47 : vector<1x8xf32>
    %cst_21 = arith.constant dense<0xFF800000> : vector<1xf32>
    %49 = vector.multi_reduction <maximumf>, %48, %cst_21 [1] : vector<1x8xf32> to vector<1xf32>
    %50 = vector.shape_cast %49 : vector<1xf32> to vector<1x1xf32>
    %51 = vector.broadcast %50 : vector<1x1xf32> to vector<1x8xf32>
    %52 = arith.subf %48, %51 : vector<1x8xf32>
    %53 = math.exp %52 : vector<1x8xf32>
    %cst_22 = arith.constant dense<0.000000e+00> : vector<1xf32>
    %54 = vector.multi_reduction <add>, %53, %cst_22 [1] : vector<1x8xf32> to vector<1xf32>
    %55 = vector.shape_cast %54 : vector<1xf32> to vector<1x1xf32>
    %56 = vector.broadcast %55 : vector<1x1xf32> to vector<1x8xf32>
    %57 = arith.divf %53, %56 : vector<1x8xf32>
    %58 = arith.mulf %57, %43 : vector<1x8xf32>
    %cst_23 = arith.constant dense<0.000000e+00> : vector<1xf32>
    %59 = vector.multi_reduction <add>, %58, %cst_23 [1] : vector<1x8xf32> to vector<1xf32>
    %60 = vector.shape_cast %59 : vector<1xf32> to vector<1x1xf32>
    %61 = vector.broadcast %22 : f32 to vector<1x1xf32>
    %62 = arith.mulf %61, %60 : vector<1x1xf32>
    %63 = vector.extract_strided_slice %27 {offsets = [1, 0], sizes = [1, 8], strides = [1, 1]} : vector<2x8xf32> to vector<1x8xf32>
    %64 = vector.extract_strided_slice %24 {offsets = [1, 0], sizes = [1, 8], strides = [1, 1]} : vector<2x8xf32> to vector<1x8xf32>
    %65 = vector.broadcast %42 : vector<1x1xf32> to vector<1x8xf32>
    %66 = arith.mulf %64, %65 : vector<1x8xf32>
    %67 = vector.extract_strided_slice %25 {offsets = [1, 0], sizes = [1, 8], strides = [1, 1]} : vector<2x8xf32> to vector<1x8xf32>
    %68 = arith.addf %66, %67 : vector<1x8xf32>
    %cst_24 = arith.constant dense<0xFF800000> : vector<1xf32>
    %69 = vector.multi_reduction <maximumf>, %68, %cst_24 [1] : vector<1x8xf32> to vector<1xf32>
    %70 = vector.shape_cast %69 : vector<1xf32> to vector<1x1xf32>
    %71 = vector.broadcast %70 : vector<1x1xf32> to vector<1x8xf32>
    %72 = arith.subf %68, %71 : vector<1x8xf32>
    %73 = math.exp %72 : vector<1x8xf32>
    %cst_25 = arith.constant dense<0.000000e+00> : vector<1xf32>
    %74 = vector.multi_reduction <add>, %73, %cst_25 [1] : vector<1x8xf32> to vector<1xf32>
    %75 = vector.shape_cast %74 : vector<1xf32> to vector<1x1xf32>
    %76 = vector.broadcast %75 : vector<1x1xf32> to vector<1x8xf32>
    %77 = arith.divf %73, %76 : vector<1x8xf32>
    %78 = arith.mulf %77, %63 : vector<1x8xf32>
    %cst_26 = arith.constant dense<0.000000e+00> : vector<1xf32>
    %79 = vector.multi_reduction <add>, %78, %cst_26 [1] : vector<1x8xf32> to vector<1xf32>
    %80 = vector.shape_cast %79 : vector<1xf32> to vector<1x1xf32>
    %81 = vector.broadcast %23 : f32 to vector<1x1xf32>
    %82 = arith.mulf %81, %80 : vector<1x1xf32>
    %83 = arith.addf %62, %82 : vector<1x1xf32>
    %cst_27 = arith.constant 0.000000e+00 : f32
    %84 = vector.broadcast %cst_27 : f32 to vector<1x256xf32>
    %85 = vector.broadcast %83 : vector<1x1xf32> to vector<1x256xf32>
    %86 = arith.addf %84, %85 : vector<1x256xf32>
    %87 = vector.extract_strided_slice %28 {offsets = [0, 0], sizes = [1, 256], strides = [1, 1]} : vector<9x256xf32> to vector<1x256xf32>
    %88 = vector.broadcast %87 : vector<1x256xf32> to vector<2x256xf32>
    %89 = arith.mulf %15, %88 : vector<2x256xf32>
    %cst_28 = arith.constant dense<0.000000e+00> : vector<2xf32>
    %90 = vector.multi_reduction <add>, %89, %cst_28 [1] : vector<2x256xf32> to vector<2xf32>
    %91 = vector.shape_cast %90 : vector<2xf32> to vector<2x1xf32>
    %92 = vector.extract_strided_slice %91 {offsets = [0, 0], sizes = [1, 1], strides = [1, 1]} : vector<2x1xf32> to vector<1x1xf32>
    %93 = vector.broadcast %19 : f32 to vector<1x1xf32>
    %94 = arith.mulf %93, %92 : vector<1x1xf32>
    %95 = vector.extract_strided_slice %91 {offsets = [1, 0], sizes = [1, 1], strides = [1, 1]} : vector<2x1xf32> to vector<1x1xf32>
    %96 = vector.broadcast %20 : f32 to vector<1x1xf32>
    %97 = arith.mulf %96, %95 : vector<1x1xf32>
    %98 = arith.addf %94, %97 : vector<1x1xf32>
    %99 = vector.broadcast %21 : f32 to vector<1x1xf32>
    %100 = arith.addf %98, %99 : vector<1x1xf32>
    %c0_29 = arith.constant 0 : index
    %c111 = arith.constant 111 : index
    %101 = vector.load %arg10[%c0_29, %c111] : memref<2x512xf32, #tpu.memory_space<vmem>>, vector<2x256xf32>
    %102 = vector.extract_strided_slice %29 {offsets = [0, 0], sizes = [1, 256], strides = [1, 1]} : vector<3x256xf32> to vector<1x256xf32>
    %103 = vector.broadcast %102 : vector<1x256xf32> to vector<2x256xf32>
    %104 = arith.mulf %101, %103 : vector<2x256xf32>
    %105 = vector.extract_strided_slice %26 {offsets = [0, 0], sizes = [1, 8], strides = [1, 1]} : vector<18x8xf32> to vector<1x8xf32>
    %106 = vector.extract_strided_slice %24 {offsets = [0, 0], sizes = [1, 8], strides = [1, 1]} : vector<2x8xf32> to vector<1x8xf32>
    %107 = vector.broadcast %100 : vector<1x1xf32> to vector<1x8xf32>
    %108 = arith.mulf %106, %107 : vector<1x8xf32>
    %109 = vector.extract_strided_slice %25 {offsets = [0, 0], sizes = [1, 8], strides = [1, 1]} : vector<2x8xf32> to vector<1x8xf32>
    %110 = arith.addf %108, %109 : vector<1x8xf32>
    %cst_30 = arith.constant dense<0xFF800000> : vector<1xf32>
    %111 = vector.multi_reduction <maximumf>, %110, %cst_30 [1] : vector<1x8xf32> to vector<1xf32>
    %112 = vector.shape_cast %111 : vector<1xf32> to vector<1x1xf32>
    %113 = vector.broadcast %112 : vector<1x1xf32> to vector<1x8xf32>
    %114 = arith.subf %110, %113 : vector<1x8xf32>
    %115 = math.exp %114 : vector<1x8xf32>
    %cst_31 = arith.constant dense<0.000000e+00> : vector<1xf32>
    %116 = vector.multi_reduction <add>, %115, %cst_31 [1] : vector<1x8xf32> to vector<1xf32>
    %117 = vector.shape_cast %116 : vector<1xf32> to vector<1x1xf32>
    %118 = vector.broadcast %117 : vector<1x1xf32> to vector<1x8xf32>
    %119 = arith.divf %115, %118 : vector<1x8xf32>
    %120 = arith.mulf %119, %105 : vector<1x8xf32>
    %cst_32 = arith.constant dense<0.000000e+00> : vector<1xf32>
    %121 = vector.multi_reduction <add>, %120, %cst_32 [1] : vector<1x8xf32> to vector<1xf32>
    %122 = vector.shape_cast %121 : vector<1xf32> to vector<1x1xf32>
    %123 = vector.broadcast %22 : f32 to vector<1x1xf32>
    %124 = arith.mulf %123, %122 : vector<1x1xf32>
    %125 = vector.extract_strided_slice %104 {offsets = [0, 0], sizes = [1, 256], strides = [1, 1]} : vector<2x256xf32> to vector<1x256xf32>
    %126 = vector.broadcast %124 : vector<1x1xf32> to vector<1x256xf32>
    %127 = arith.mulf %126, %125 : vector<1x256xf32>
    %128 = arith.addf %86, %127 : vector<1x256xf32>
    %129 = vector.extract_strided_slice %26 {offsets = [9, 0], sizes = [1, 8], strides = [1, 1]} : vector<18x8xf32> to vector<1x8xf32>
    %130 = vector.extract_strided_slice %24 {offsets = [1, 0], sizes = [1, 8], strides = [1, 1]} : vector<2x8xf32> to vector<1x8xf32>
    %131 = vector.broadcast %100 : vector<1x1xf32> to vector<1x8xf32>
    %132 = arith.mulf %130, %131 : vector<1x8xf32>
    %133 = vector.extract_strided_slice %25 {offsets = [1, 0], sizes = [1, 8], strides = [1, 1]} : vector<2x8xf32> to vector<1x8xf32>
    %134 = arith.addf %132, %133 : vector<1x8xf32>
    %cst_33 = arith.constant dense<0xFF800000> : vector<1xf32>
    %135 = vector.multi_reduction <maximumf>, %134, %cst_33 [1] : vector<1x8xf32> to vector<1xf32>
    %136 = vector.shape_cast %135 : vector<1xf32> to vector<1x1xf32>
    %137 = vector.broadcast %136 : vector<1x1xf32> to vector<1x8xf32>
    %138 = arith.subf %134, %137 : vector<1x8xf32>
    %139 = math.exp %138 : vector<1x8xf32>
    %cst_34 = arith.constant dense<0.000000e+00> : vector<1xf32>
    %140 = vector.multi_reduction <add>, %139, %cst_34 [1] : vector<1x8xf32> to vector<1xf32>
    %141 = vector.shape_cast %140 : vector<1xf32> to vector<1x1xf32>
    %142 = vector.broadcast %141 : vector<1x1xf32> to vector<1x8xf32>
    %143 = arith.divf %139, %142 : vector<1x8xf32>
    %144 = arith.mulf %143, %129 : vector<1x8xf32>
    %cst_35 = arith.constant dense<0.000000e+00> : vector<1xf32>
    %145 = vector.multi_reduction <add>, %144, %cst_35 [1] : vector<1x8xf32> to vector<1xf32>
    %146 = vector.shape_cast %145 : vector<1xf32> to vector<1x1xf32>
    %147 = vector.broadcast %23 : f32 to vector<1x1xf32>
    %148 = arith.mulf %147, %146 : vector<1x1xf32>
    %149 = vector.extract_strided_slice %104 {offsets = [1, 0], sizes = [1, 256], strides = [1, 1]} : vector<2x256xf32> to vector<1x256xf32>
    %150 = vector.broadcast %148 : vector<1x1xf32> to vector<1x256xf32>
    %151 = arith.mulf %150, %149 : vector<1x256xf32>
    %152 = arith.addf %128, %151 : vector<1x256xf32>
    %153 = vector.extract_strided_slice %28 {offsets = [1, 0], sizes = [1, 256], strides = [1, 1]} : vector<9x256xf32> to vector<1x256xf32>
    %154 = vector.broadcast %153 : vector<1x256xf32> to vector<2x256xf32>
    %155 = arith.mulf %15, %154 : vector<2x256xf32>
    %cst_36 = arith.constant dense<0.000000e+00> : vector<2xf32>
    %156 = vector.multi_reduction <add>, %155, %cst_36 [1] : vector<2x256xf32> to vector<2xf32>
    %157 = vector.shape_cast %156 : vector<2xf32> to vector<2x1xf32>
    %158 = vector.extract_strided_slice %157 {offsets = [0, 0], sizes = [1, 1], strides = [1, 1]} : vector<2x1xf32> to vector<1x1xf32>
    %159 = vector.broadcast %19 : f32 to vector<1x1xf32>
    %160 = arith.mulf %159, %158 : vector<1x1xf32>
    %161 = vector.extract_strided_slice %157 {offsets = [1, 0], sizes = [1, 1], strides = [1, 1]} : vector<2x1xf32> to vector<1x1xf32>
    %162 = vector.broadcast %20 : f32 to vector<1x1xf32>
    %163 = arith.mulf %162, %161 : vector<1x1xf32>
    %164 = arith.addf %160, %163 : vector<1x1xf32>
    %165 = vector.broadcast %21 : f32 to vector<1x1xf32>
    %166 = arith.addf %164, %165 : vector<1x1xf32>
    %c0_37 = arith.constant 0 : index
    %c112 = arith.constant 112 : index
    %167 = vector.load %arg10[%c0_37, %c112] : memref<2x512xf32, #tpu.memory_space<vmem>>, vector<2x256xf32>
    %168 = vector.extract_strided_slice %26 {offsets = [1, 0], sizes = [1, 8], strides = [1, 1]} : vector<18x8xf32> to vector<1x8xf32>
    %169 = vector.extract_strided_slice %24 {offsets = [0, 0], sizes = [1, 8], strides = [1, 1]} : vector<2x8xf32> to vector<1x8xf32>
    %170 = vector.broadcast %166 : vector<1x1xf32> to vector<1x8xf32>
    %171 = arith.mulf %169, %170 : vector<1x8xf32>
    %172 = vector.extract_strided_slice %25 {offsets = [0, 0], sizes = [1, 8], strides = [1, 1]} : vector<2x8xf32> to vector<1x8xf32>
    %173 = arith.addf %171, %172 : vector<1x8xf32>
    %cst_38 = arith.constant dense<0xFF800000> : vector<1xf32>
    %174 = vector.multi_reduction <maximumf>, %173, %cst_38 [1] : vector<1x8xf32> to vector<1xf32>
    %175 = vector.shape_cast %174 : vector<1xf32> to vector<1x1xf32>
    %176 = vector.broadcast %175 : vector<1x1xf32> to vector<1x8xf32>
    %177 = arith.subf %173, %176 : vector<1x8xf32>
    %178 = math.exp %177 : vector<1x8xf32>
    %cst_39 = arith.constant dense<0.000000e+00> : vector<1xf32>
    %179 = vector.multi_reduction <add>, %178, %cst_39 [1] : vector<1x8xf32> to vector<1xf32>
    %180 = vector.shape_cast %179 : vector<1xf32> to vector<1x1xf32>
    %181 = vector.broadcast %180 : vector<1x1xf32> to vector<1x8xf32>
    %182 = arith.divf %178, %181 : vector<1x8xf32>
    %183 = arith.mulf %182, %168 : vector<1x8xf32>
    %cst_40 = arith.constant dense<0.000000e+00> : vector<1xf32>
    %184 = vector.multi_reduction <add>, %183, %cst_40 [1] : vector<1x8xf32> to vector<1xf32>
    %185 = vector.shape_cast %184 : vector<1xf32> to vector<1x1xf32>
    %186 = vector.broadcast %22 : f32 to vector<1x1xf32>
    %187 = arith.mulf %186, %185 : vector<1x1xf32>
    %188 = vector.extract_strided_slice %167 {offsets = [0, 0], sizes = [1, 256], strides = [1, 1]} : vector<2x256xf32> to vector<1x256xf32>
    %189 = vector.broadcast %187 : vector<1x1xf32> to vector<1x256xf32>
    %190 = arith.mulf %189, %188 : vector<1x256xf32>
    %191 = arith.addf %152, %190 : vector<1x256xf32>
    %192 = vector.extract_strided_slice %26 {offsets = [10, 0], sizes = [1, 8], strides = [1, 1]} : vector<18x8xf32> to vector<1x8xf32>
    %193 = vector.extract_strided_slice %24 {offsets = [1, 0], sizes = [1, 8], strides = [1, 1]} : vector<2x8xf32> to vector<1x8xf32>
    %194 = vector.broadcast %166 : vector<1x1xf32> to vector<1x8xf32>
    %195 = arith.mulf %193, %194 : vector<1x8xf32>
    %196 = vector.extract_strided_slice %25 {offsets = [1, 0], sizes = [1, 8], strides = [1, 1]} : vector<2x8xf32> to vector<1x8xf32>
    %197 = arith.addf %195, %196 : vector<1x8xf32>
    %cst_41 = arith.constant dense<0xFF800000> : vector<1xf32>
    %198 = vector.multi_reduction <maximumf>, %197, %cst_41 [1] : vector<1x8xf32> to vector<1xf32>
    %199 = vector.shape_cast %198 : vector<1xf32> to vector<1x1xf32>
    %200 = vector.broadcast %199 : vector<1x1xf32> to vector<1x8xf32>
    %201 = arith.subf %197, %200 : vector<1x8xf32>
    %202 = math.exp %201 : vector<1x8xf32>
    %cst_42 = arith.constant dense<0.000000e+00> : vector<1xf32>
    %203 = vector.multi_reduction <add>, %202, %cst_42 [1] : vector<1x8xf32> to vector<1xf32>
    %204 = vector.shape_cast %203 : vector<1xf32> to vector<1x1xf32>
    %205 = vector.broadcast %204 : vector<1x1xf32> to vector<1x8xf32>
    %206 = arith.divf %202, %205 : vector<1x8xf32>
    %207 = arith.mulf %206, %192 : vector<1x8xf32>
    %cst_43 = arith.constant dense<0.000000e+00> : vector<1xf32>
    %208 = vector.multi_reduction <add>, %207, %cst_43 [1] : vector<1x8xf32> to vector<1xf32>
    %209 = vector.shape_cast %208 : vector<1xf32> to vector<1x1xf32>
    %210 = vector.broadcast %23 : f32 to vector<1x1xf32>
    %211 = arith.mulf %210, %209 : vector<1x1xf32>
    %212 = vector.extract_strided_slice %167 {offsets = [1, 0], sizes = [1, 256], strides = [1, 1]} : vector<2x256xf32> to vector<1x256xf32>
    %213 = vector.broadcast %211 : vector<1x1xf32> to vector<1x256xf32>
    %214 = arith.mulf %213, %212 : vector<1x256xf32>
    %215 = arith.addf %191, %214 : vector<1x256xf32>
    %216 = vector.extract_strided_slice %28 {offsets = [2, 0], sizes = [1, 256], strides = [1, 1]} : vector<9x256xf32> to vector<1x256xf32>
    %217 = vector.broadcast %216 : vector<1x256xf32> to vector<2x256xf32>
    %218 = arith.mulf %15, %217 : vector<2x256xf32>
    %cst_44 = arith.constant dense<0.000000e+00> : vector<2xf32>
    %219 = vector.multi_reduction <add>, %218, %cst_44 [1] : vector<2x256xf32> to vector<2xf32>
    %220 = vector.shape_cast %219 : vector<2xf32> to vector<2x1xf32>
    %221 = vector.extract_strided_slice %220 {offsets = [0, 0], sizes = [1, 1], strides = [1, 1]} : vector<2x1xf32> to vector<1x1xf32>
    %222 = vector.broadcast %19 : f32 to vector<1x1xf32>
    %223 = arith.mulf %222, %221 : vector<1x1xf32>
    %224 = vector.extract_strided_slice %220 {offsets = [1, 0], sizes = [1, 1], strides = [1, 1]} : vector<2x1xf32> to vector<1x1xf32>
    %225 = vector.broadcast %20 : f32 to vector<1x1xf32>
    %226 = arith.mulf %225, %224 : vector<1x1xf32>
    %227 = arith.addf %223, %226 : vector<1x1xf32>
    %228 = vector.broadcast %21 : f32 to vector<1x1xf32>
    %229 = arith.addf %227, %228 : vector<1x1xf32>
    %c0_45 = arith.constant 0 : index
    %c113 = arith.constant 113 : index
    %230 = vector.load %arg10[%c0_45, %c113] : memref<2x512xf32, #tpu.memory_space<vmem>>, vector<2x256xf32>
    %231 = vector.extract_strided_slice %29 {offsets = [2, 0], sizes = [1, 256], strides = [1, 1]} : vector<3x256xf32> to vector<1x256xf32>
    %232 = vector.broadcast %231 : vector<1x256xf32> to vector<2x256xf32>
    %233 = arith.mulf %230, %232 : vector<2x256xf32>
    %234 = vector.extract_strided_slice %26 {offsets = [2, 0], sizes = [1, 8], strides = [1, 1]} : vector<18x8xf32> to vector<1x8xf32>
    %235 = vector.extract_strided_slice %24 {offsets = [0, 0], sizes = [1, 8], strides = [1, 1]} : vector<2x8xf32> to vector<1x8xf32>
    %236 = vector.broadcast %229 : vector<1x1xf32> to vector<1x8xf32>
    %237 = arith.mulf %235, %236 : vector<1x8xf32>
    %238 = vector.extract_strided_slice %25 {offsets = [0, 0], sizes = [1, 8], strides = [1, 1]} : vector<2x8xf32> to vector<1x8xf32>
    %239 = arith.addf %237, %238 : vector<1x8xf32>
    %cst_46 = arith.constant dense<0xFF800000> : vector<1xf32>
    %240 = vector.multi_reduction <maximumf>, %239, %cst_46 [1] : vector<1x8xf32> to vector<1xf32>
    %241 = vector.shape_cast %240 : vector<1xf32> to vector<1x1xf32>
    %242 = vector.broadcast %241 : vector<1x1xf32> to vector<1x8xf32>
    %243 = arith.subf %239, %242 : vector<1x8xf32>
    %244 = math.exp %243 : vector<1x8xf32>
    %cst_47 = arith.constant dense<0.000000e+00> : vector<1xf32>
    %245 = vector.multi_reduction <add>, %244, %cst_47 [1] : vector<1x8xf32> to vector<1xf32>
    %246 = vector.shape_cast %245 : vector<1xf32> to vector<1x1xf32>
    %247 = vector.broadcast %246 : vector<1x1xf32> to vector<1x8xf32>
    %248 = arith.divf %244, %247 : vector<1x8xf32>
    %249 = arith.mulf %248, %234 : vector<1x8xf32>
    %cst_48 = arith.constant dense<0.000000e+00> : vector<1xf32>
    %250 = vector.multi_reduction <add>, %249, %cst_48 [1] : vector<1x8xf32> to vector<1xf32>
    %251 = vector.shape_cast %250 : vector<1xf32> to vector<1x1xf32>
    %252 = vector.broadcast %22 : f32 to vector<1x1xf32>
    %253 = arith.mulf %252, %251 : vector<1x1xf32>
    %254 = vector.extract_strided_slice %233 {offsets = [0, 0], sizes = [1, 256], strides = [1, 1]} : vector<2x256xf32> to vector<1x256xf32>
    %255 = vector.broadcast %253 : vector<1x1xf32> to vector<1x256xf32>
    %256 = arith.mulf %255, %254 : vector<1x256xf32>
    %257 = arith.addf %215, %256 : vector<1x256xf32>
    %258 = vector.extract_strided_slice %26 {offsets = [11, 0], sizes = [1, 8], strides = [1, 1]} : vector<18x8xf32> to vector<1x8xf32>
    %259 = vector.extract_strided_slice %24 {offsets = [1, 0], sizes = [1, 8], strides = [1, 1]} : vector<2x8xf32> to vector<1x8xf32>
    %260 = vector.broadcast %229 : vector<1x1xf32> to vector<1x8xf32>
    %261 = arith.mulf %259, %260 : vector<1x8xf32>
    %262 = vector.extract_strided_slice %25 {offsets = [1, 0], sizes = [1, 8], strides = [1, 1]} : vector<2x8xf32> to vector<1x8xf32>
    %263 = arith.addf %261, %262 : vector<1x8xf32>
    %cst_49 = arith.constant dense<0xFF800000> : vector<1xf32>
    %264 = vector.multi_reduction <maximumf>, %263, %cst_49 [1] : vector<1x8xf32> to vector<1xf32>
    %265 = vector.shape_cast %264 : vector<1xf32> to vector<1x1xf32>
    %266 = vector.broadcast %265 : vector<1x1xf32> to vector<1x8xf32>
    %267 = arith.subf %263, %266 : vector<1x8xf32>
    %268 = math.exp %267 : vector<1x8xf32>
    %cst_50 = arith.constant dense<0.000000e+00> : vector<1xf32>
    %269 = vector.multi_reduction <add>, %268, %cst_50 [1] : vector<1x8xf32> to vector<1xf32>
    %270 = vector.shape_cast %269 : vector<1xf32> to vector<1x1xf32>
    %271 = vector.broadcast %270 : vector<1x1xf32> to vector<1x8xf32>
    %272 = arith.divf %268, %271 : vector<1x8xf32>
    %273 = arith.mulf %272, %258 : vector<1x8xf32>
    %cst_51 = arith.constant dense<0.000000e+00> : vector<1xf32>
    %274 = vector.multi_reduction <add>, %273, %cst_51 [1] : vector<1x8xf32> to vector<1xf32>
    %275 = vector.shape_cast %274 : vector<1xf32> to vector<1x1xf32>
    %276 = vector.broadcast %23 : f32 to vector<1x1xf32>
    %277 = arith.mulf %276, %275 : vector<1x1xf32>
    %278 = vector.extract_strided_slice %233 {offsets = [1, 0], sizes = [1, 256], strides = [1, 1]} : vector<2x256xf32> to vector<1x256xf32>
    %279 = vector.broadcast %277 : vector<1x1xf32> to vector<1x256xf32>
    %280 = arith.mulf %279, %278 : vector<1x256xf32>
    %281 = arith.addf %257, %280 : vector<1x256xf32>
    %282 = vector.extract_strided_slice %28 {offsets = [3, 0], sizes = [1, 256], strides = [1, 1]} : vector<9x256xf32> to vector<1x256xf32>
    %283 = vector.broadcast %282 : vector<1x256xf32> to vector<2x256xf32>
    %284 = arith.mulf %15, %283 : vector<2x256xf32>
    %cst_52 = arith.constant dense<0.000000e+00> : vector<2xf32>
    %285 = vector.multi_reduction <add>, %284, %cst_52 [1] : vector<2x256xf32> to vector<2xf32>
    %286 = vector.shape_cast %285 : vector<2xf32> to vector<2x1xf32>
    %287 = vector.extract_strided_slice %286 {offsets = [0, 0], sizes = [1, 1], strides = [1, 1]} : vector<2x1xf32> to vector<1x1xf32>
    %288 = vector.broadcast %19 : f32 to vector<1x1xf32>
    %289 = arith.mulf %288, %287 : vector<1x1xf32>
    %290 = vector.extract_strided_slice %286 {offsets = [1, 0], sizes = [1, 1], strides = [1, 1]} : vector<2x1xf32> to vector<1x1xf32>
    %291 = vector.broadcast %20 : f32 to vector<1x1xf32>
    %292 = arith.mulf %291, %290 : vector<1x1xf32>
    %293 = arith.addf %289, %292 : vector<1x1xf32>
    %294 = vector.broadcast %21 : f32 to vector<1x1xf32>
    %295 = arith.addf %293, %294 : vector<1x1xf32>
    %c0_53 = arith.constant 0 : index
    %c127 = arith.constant 127 : index
    %296 = vector.load %arg10[%c0_53, %c127] : memref<2x512xf32, #tpu.memory_space<vmem>>, vector<2x256xf32>
    %297 = vector.extract_strided_slice %29 {offsets = [0, 0], sizes = [1, 256], strides = [1, 1]} : vector<3x256xf32> to vector<1x256xf32>
    %298 = vector.broadcast %297 : vector<1x256xf32> to vector<2x256xf32>
    %299 = arith.mulf %296, %298 : vector<2x256xf32>
    %300 = vector.extract_strided_slice %26 {offsets = [3, 0], sizes = [1, 8], strides = [1, 1]} : vector<18x8xf32> to vector<1x8xf32>
    %301 = vector.extract_strided_slice %24 {offsets = [0, 0], sizes = [1, 8], strides = [1, 1]} : vector<2x8xf32> to vector<1x8xf32>
    %302 = vector.broadcast %295 : vector<1x1xf32> to vector<1x8xf32>
    %303 = arith.mulf %301, %302 : vector<1x8xf32>
    %304 = vector.extract_strided_slice %25 {offsets = [0, 0], sizes = [1, 8], strides = [1, 1]} : vector<2x8xf32> to vector<1x8xf32>
    %305 = arith.addf %303, %304 : vector<1x8xf32>
    %cst_54 = arith.constant dense<0xFF800000> : vector<1xf32>
    %306 = vector.multi_reduction <maximumf>, %305, %cst_54 [1] : vector<1x8xf32> to vector<1xf32>
    %307 = vector.shape_cast %306 : vector<1xf32> to vector<1x1xf32>
    %308 = vector.broadcast %307 : vector<1x1xf32> to vector<1x8xf32>
    %309 = arith.subf %305, %308 : vector<1x8xf32>
    %310 = math.exp %309 : vector<1x8xf32>
    %cst_55 = arith.constant dense<0.000000e+00> : vector<1xf32>
    %311 = vector.multi_reduction <add>, %310, %cst_55 [1] : vector<1x8xf32> to vector<1xf32>
    %312 = vector.shape_cast %311 : vector<1xf32> to vector<1x1xf32>
    %313 = vector.broadcast %312 : vector<1x1xf32> to vector<1x8xf32>
    %314 = arith.divf %310, %313 : vector<1x8xf32>
    %315 = arith.mulf %314, %300 : vector<1x8xf32>
    %cst_56 = arith.constant dense<0.000000e+00> : vector<1xf32>
    %316 = vector.multi_reduction <add>, %315, %cst_56 [1] : vector<1x8xf32> to vector<1xf32>
    %317 = vector.shape_cast %316 : vector<1xf32> to vector<1x1xf32>
    %318 = vector.broadcast %22 : f32 to vector<1x1xf32>
    %319 = arith.mulf %318, %317 : vector<1x1xf32>
    %320 = vector.extract_strided_slice %299 {offsets = [0, 0], sizes = [1, 256], strides = [1, 1]} : vector<2x256xf32> to vector<1x256xf32>
    %321 = vector.broadcast %319 : vector<1x1xf32> to vector<1x256xf32>
    %322 = arith.mulf %321, %320 : vector<1x256xf32>
    %323 = arith.addf %281, %322 : vector<1x256xf32>
    %324 = vector.extract_strided_slice %26 {offsets = [12, 0], sizes = [1, 8], strides = [1, 1]} : vector<18x8xf32> to vector<1x8xf32>
    %325 = vector.extract_strided_slice %24 {offsets = [1, 0], sizes = [1, 8], strides = [1, 1]} : vector<2x8xf32> to vector<1x8xf32>
    %326 = vector.broadcast %295 : vector<1x1xf32> to vector<1x8xf32>
    %327 = arith.mulf %325, %326 : vector<1x8xf32>
    %328 = vector.extract_strided_slice %25 {offsets = [1, 0], sizes = [1, 8], strides = [1, 1]} : vector<2x8xf32> to vector<1x8xf32>
    %329 = arith.addf %327, %328 : vector<1x8xf32>
    %cst_57 = arith.constant dense<0xFF800000> : vector<1xf32>
    %330 = vector.multi_reduction <maximumf>, %329, %cst_57 [1] : vector<1x8xf32> to vector<1xf32>
    %331 = vector.shape_cast %330 : vector<1xf32> to vector<1x1xf32>
    %332 = vector.broadcast %331 : vector<1x1xf32> to vector<1x8xf32>
    %333 = arith.subf %329, %332 : vector<1x8xf32>
    %334 = math.exp %333 : vector<1x8xf32>
    %cst_58 = arith.constant dense<0.000000e+00> : vector<1xf32>
    %335 = vector.multi_reduction <add>, %334, %cst_58 [1] : vector<1x8xf32> to vector<1xf32>
    %336 = vector.shape_cast %335 : vector<1xf32> to vector<1x1xf32>
    %337 = vector.broadcast %336 : vector<1x1xf32> to vector<1x8xf32>
    %338 = arith.divf %334, %337 : vector<1x8xf32>
    %339 = arith.mulf %338, %324 : vector<1x8xf32>
    %cst_59 = arith.constant dense<0.000000e+00> : vector<1xf32>
    %340 = vector.multi_reduction <add>, %339, %cst_59 [1] : vector<1x8xf32> to vector<1xf32>
    %341 = vector.shape_cast %340 : vector<1xf32> to vector<1x1xf32>
    %342 = vector.broadcast %23 : f32 to vector<1x1xf32>
    %343 = arith.mulf %342, %341 : vector<1x1xf32>
    %344 = vector.extract_strided_slice %299 {offsets = [1, 0], sizes = [1, 256], strides = [1, 1]} : vector<2x256xf32> to vector<1x256xf32>
    %345 = vector.broadcast %343 : vector<1x1xf32> to vector<1x256xf32>
    %346 = arith.mulf %345, %344 : vector<1x256xf32>
    %347 = arith.addf %323, %346 : vector<1x256xf32>
    %348 = vector.extract_strided_slice %28 {offsets = [4, 0], sizes = [1, 256], strides = [1, 1]} : vector<9x256xf32> to vector<1x256xf32>
    %349 = vector.broadcast %348 : vector<1x256xf32> to vector<2x256xf32>
    %350 = arith.mulf %15, %349 : vector<2x256xf32>
    %cst_60 = arith.constant dense<0.000000e+00> : vector<2xf32>
    %351 = vector.multi_reduction <add>, %350, %cst_60 [1] : vector<2x256xf32> to vector<2xf32>
    %352 = vector.shape_cast %351 : vector<2xf32> to vector<2x1xf32>
    %353 = vector.extract_strided_slice %352 {offsets = [0, 0], sizes = [1, 1], strides = [1, 1]} : vector<2x1xf32> to vector<1x1xf32>
    %354 = vector.broadcast %19 : f32 to vector<1x1xf32>
    %355 = arith.mulf %354, %353 : vector<1x1xf32>
    %356 = vector.extract_strided_slice %352 {offsets = [1, 0], sizes = [1, 1], strides = [1, 1]} : vector<2x1xf32> to vector<1x1xf32>
    %357 = vector.broadcast %20 : f32 to vector<1x1xf32>
    %358 = arith.mulf %357, %356 : vector<1x1xf32>
    %359 = arith.addf %355, %358 : vector<1x1xf32>
    %360 = vector.broadcast %21 : f32 to vector<1x1xf32>
    %361 = arith.addf %359, %360 : vector<1x1xf32>
    %c0_61 = arith.constant 0 : index
    %c128_62 = arith.constant 128 : index
    %362 = vector.load %arg10[%c0_61, %c128_62] : memref<2x512xf32, #tpu.memory_space<vmem>>, vector<2x256xf32>
    %363 = vector.extract_strided_slice %26 {offsets = [4, 0], sizes = [1, 8], strides = [1, 1]} : vector<18x8xf32> to vector<1x8xf32>
    %364 = vector.extract_strided_slice %24 {offsets = [0, 0], sizes = [1, 8], strides = [1, 1]} : vector<2x8xf32> to vector<1x8xf32>
    %365 = vector.broadcast %361 : vector<1x1xf32> to vector<1x8xf32>
    %366 = arith.mulf %364, %365 : vector<1x8xf32>
    %367 = vector.extract_strided_slice %25 {offsets = [0, 0], sizes = [1, 8], strides = [1, 1]} : vector<2x8xf32> to vector<1x8xf32>
    %368 = arith.addf %366, %367 : vector<1x8xf32>
    %cst_63 = arith.constant dense<0xFF800000> : vector<1xf32>
    %369 = vector.multi_reduction <maximumf>, %368, %cst_63 [1] : vector<1x8xf32> to vector<1xf32>
    %370 = vector.shape_cast %369 : vector<1xf32> to vector<1x1xf32>
    %371 = vector.broadcast %370 : vector<1x1xf32> to vector<1x8xf32>
    %372 = arith.subf %368, %371 : vector<1x8xf32>
    %373 = math.exp %372 : vector<1x8xf32>
    %cst_64 = arith.constant dense<0.000000e+00> : vector<1xf32>
    %374 = vector.multi_reduction <add>, %373, %cst_64 [1] : vector<1x8xf32> to vector<1xf32>
    %375 = vector.shape_cast %374 : vector<1xf32> to vector<1x1xf32>
    %376 = vector.broadcast %375 : vector<1x1xf32> to vector<1x8xf32>
    %377 = arith.divf %373, %376 : vector<1x8xf32>
    %378 = arith.mulf %377, %363 : vector<1x8xf32>
    %cst_65 = arith.constant dense<0.000000e+00> : vector<1xf32>
    %379 = vector.multi_reduction <add>, %378, %cst_65 [1] : vector<1x8xf32> to vector<1xf32>
    %380 = vector.shape_cast %379 : vector<1xf32> to vector<1x1xf32>
    %381 = vector.broadcast %22 : f32 to vector<1x1xf32>
    %382 = arith.mulf %381, %380 : vector<1x1xf32>
    %383 = vector.extract_strided_slice %362 {offsets = [0, 0], sizes = [1, 256], strides = [1, 1]} : vector<2x256xf32> to vector<1x256xf32>
    %384 = vector.broadcast %382 : vector<1x1xf32> to vector<1x256xf32>
    %385 = arith.mulf %384, %383 : vector<1x256xf32>
    %386 = arith.addf %347, %385 : vector<1x256xf32>
    %387 = vector.extract_strided_slice %26 {offsets = [13, 0], sizes = [1, 8], strides = [1, 1]} : vector<18x8xf32> to vector<1x8xf32>
    %388 = vector.extract_strided_slice %24 {offsets = [1, 0], sizes = [1, 8], strides = [1, 1]} : vector<2x8xf32> to vector<1x8xf32>
    %389 = vector.broadcast %361 : vector<1x1xf32> to vector<1x8xf32>
    %390 = arith.mulf %388, %389 : vector<1x8xf32>
    %391 = vector.extract_strided_slice %25 {offsets = [1, 0], sizes = [1, 8], strides = [1, 1]} : vector<2x8xf32> to vector<1x8xf32>
    %392 = arith.addf %390, %391 : vector<1x8xf32>
    %cst_66 = arith.constant dense<0xFF800000> : vector<1xf32>
    %393 = vector.multi_reduction <maximumf>, %392, %cst_66 [1] : vector<1x8xf32> to vector<1xf32>
    %394 = vector.shape_cast %393 : vector<1xf32> to vector<1x1xf32>
    %395 = vector.broadcast %394 : vector<1x1xf32> to vector<1x8xf32>
    %396 = arith.subf %392, %395 : vector<1x8xf32>
    %397 = math.exp %396 : vector<1x8xf32>
    %cst_67 = arith.constant dense<0.000000e+00> : vector<1xf32>
    %398 = vector.multi_reduction <add>, %397, %cst_67 [1] : vector<1x8xf32> to vector<1xf32>
    %399 = vector.shape_cast %398 : vector<1xf32> to vector<1x1xf32>
    %400 = vector.broadcast %399 : vector<1x1xf32> to vector<1x8xf32>
    %401 = arith.divf %397, %400 : vector<1x8xf32>
    %402 = arith.mulf %401, %387 : vector<1x8xf32>
    %cst_68 = arith.constant dense<0.000000e+00> : vector<1xf32>
    %403 = vector.multi_reduction <add>, %402, %cst_68 [1] : vector<1x8xf32> to vector<1xf32>
    %404 = vector.shape_cast %403 : vector<1xf32> to vector<1x1xf32>
    %405 = vector.broadcast %23 : f32 to vector<1x1xf32>
    %406 = arith.mulf %405, %404 : vector<1x1xf32>
    %407 = vector.extract_strided_slice %362 {offsets = [1, 0], sizes = [1, 256], strides = [1, 1]} : vector<2x256xf32> to vector<1x256xf32>
    %408 = vector.broadcast %406 : vector<1x1xf32> to vector<1x256xf32>
    %409 = arith.mulf %408, %407 : vector<1x256xf32>
    %410 = arith.addf %386, %409 : vector<1x256xf32>
    %411 = vector.extract_strided_slice %28 {offsets = [5, 0], sizes = [1, 256], strides = [1, 1]} : vector<9x256xf32> to vector<1x256xf32>
    %412 = vector.broadcast %411 : vector<1x256xf32> to vector<2x256xf32>
    %413 = arith.mulf %15, %412 : vector<2x256xf32>
    %cst_69 = arith.constant dense<0.000000e+00> : vector<2xf32>
    %414 = vector.multi_reduction <add>, %413, %cst_69 [1] : vector<2x256xf32> to vector<2xf32>
    %415 = vector.shape_cast %414 : vector<2xf32> to vector<2x1xf32>
    %416 = vector.extract_strided_slice %415 {offsets = [0, 0], sizes = [1, 1], strides = [1, 1]} : vector<2x1xf32> to vector<1x1xf32>
    %417 = vector.broadcast %19 : f32 to vector<1x1xf32>
    %418 = arith.mulf %417, %416 : vector<1x1xf32>
    %419 = vector.extract_strided_slice %415 {offsets = [1, 0], sizes = [1, 1], strides = [1, 1]} : vector<2x1xf32> to vector<1x1xf32>
    %420 = vector.broadcast %20 : f32 to vector<1x1xf32>
    %421 = arith.mulf %420, %419 : vector<1x1xf32>
    %422 = arith.addf %418, %421 : vector<1x1xf32>
    %423 = vector.broadcast %21 : f32 to vector<1x1xf32>
    %424 = arith.addf %422, %423 : vector<1x1xf32>
    %c0_70 = arith.constant 0 : index
    %c129 = arith.constant 129 : index
    %425 = vector.load %arg10[%c0_70, %c129] : memref<2x512xf32, #tpu.memory_space<vmem>>, vector<2x256xf32>
    %426 = vector.extract_strided_slice %29 {offsets = [2, 0], sizes = [1, 256], strides = [1, 1]} : vector<3x256xf32> to vector<1x256xf32>
    %427 = vector.broadcast %426 : vector<1x256xf32> to vector<2x256xf32>
    %428 = arith.mulf %425, %427 : vector<2x256xf32>
    %429 = vector.extract_strided_slice %26 {offsets = [5, 0], sizes = [1, 8], strides = [1, 1]} : vector<18x8xf32> to vector<1x8xf32>
    %430 = vector.extract_strided_slice %24 {offsets = [0, 0], sizes = [1, 8], strides = [1, 1]} : vector<2x8xf32> to vector<1x8xf32>
    %431 = vector.broadcast %424 : vector<1x1xf32> to vector<1x8xf32>
    %432 = arith.mulf %430, %431 : vector<1x8xf32>
    %433 = vector.extract_strided_slice %25 {offsets = [0, 0], sizes = [1, 8], strides = [1, 1]} : vector<2x8xf32> to vector<1x8xf32>
    %434 = arith.addf %432, %433 : vector<1x8xf32>
    %cst_71 = arith.constant dense<0xFF800000> : vector<1xf32>
    %435 = vector.multi_reduction <maximumf>, %434, %cst_71 [1] : vector<1x8xf32> to vector<1xf32>
    %436 = vector.shape_cast %435 : vector<1xf32> to vector<1x1xf32>
    %437 = vector.broadcast %436 : vector<1x1xf32> to vector<1x8xf32>
    %438 = arith.subf %434, %437 : vector<1x8xf32>
    %439 = math.exp %438 : vector<1x8xf32>
    %cst_72 = arith.constant dense<0.000000e+00> : vector<1xf32>
    %440 = vector.multi_reduction <add>, %439, %cst_72 [1] : vector<1x8xf32> to vector<1xf32>
    %441 = vector.shape_cast %440 : vector<1xf32> to vector<1x1xf32>
    %442 = vector.broadcast %441 : vector<1x1xf32> to vector<1x8xf32>
    %443 = arith.divf %439, %442 : vector<1x8xf32>
    %444 = arith.mulf %443, %429 : vector<1x8xf32>
    %cst_73 = arith.constant dense<0.000000e+00> : vector<1xf32>
    %445 = vector.multi_reduction <add>, %444, %cst_73 [1] : vector<1x8xf32> to vector<1xf32>
    %446 = vector.shape_cast %445 : vector<1xf32> to vector<1x1xf32>
    %447 = vector.broadcast %22 : f32 to vector<1x1xf32>
    %448 = arith.mulf %447, %446 : vector<1x1xf32>
    %449 = vector.extract_strided_slice %428 {offsets = [0, 0], sizes = [1, 256], strides = [1, 1]} : vector<2x256xf32> to vector<1x256xf32>
    %450 = vector.broadcast %448 : vector<1x1xf32> to vector<1x256xf32>
    %451 = arith.mulf %450, %449 : vector<1x256xf32>
    %452 = arith.addf %410, %451 : vector<1x256xf32>
    %453 = vector.extract_strided_slice %26 {offsets = [14, 0], sizes = [1, 8], strides = [1, 1]} : vector<18x8xf32> to vector<1x8xf32>
    %454 = vector.extract_strided_slice %24 {offsets = [1, 0], sizes = [1, 8], strides = [1, 1]} : vector<2x8xf32> to vector<1x8xf32>
    %455 = vector.broadcast %424 : vector<1x1xf32> to vector<1x8xf32>
    %456 = arith.mulf %454, %455 : vector<1x8xf32>
    %457 = vector.extract_strided_slice %25 {offsets = [1, 0], sizes = [1, 8], strides = [1, 1]} : vector<2x8xf32> to vector<1x8xf32>
    %458 = arith.addf %456, %457 : vector<1x8xf32>
    %cst_74 = arith.constant dense<0xFF800000> : vector<1xf32>
    %459 = vector.multi_reduction <maximumf>, %458, %cst_74 [1] : vector<1x8xf32> to vector<1xf32>
    %460 = vector.shape_cast %459 : vector<1xf32> to vector<1x1xf32>
    %461 = vector.broadcast %460 : vector<1x1xf32> to vector<1x8xf32>
    %462 = arith.subf %458, %461 : vector<1x8xf32>
    %463 = math.exp %462 : vector<1x8xf32>
    %cst_75 = arith.constant dense<0.000000e+00> : vector<1xf32>
    %464 = vector.multi_reduction <add>, %463, %cst_75 [1] : vector<1x8xf32> to vector<1xf32>
    %465 = vector.shape_cast %464 : vector<1xf32> to vector<1x1xf32>
    %466 = vector.broadcast %465 : vector<1x1xf32> to vector<1x8xf32>
    %467 = arith.divf %463, %466 : vector<1x8xf32>
    %468 = arith.mulf %467, %453 : vector<1x8xf32>
    %cst_76 = arith.constant dense<0.000000e+00> : vector<1xf32>
    %469 = vector.multi_reduction <add>, %468, %cst_76 [1] : vector<1x8xf32> to vector<1xf32>
    %470 = vector.shape_cast %469 : vector<1xf32> to vector<1x1xf32>
    %471 = vector.broadcast %23 : f32 to vector<1x1xf32>
    %472 = arith.mulf %471, %470 : vector<1x1xf32>
    %473 = vector.extract_strided_slice %428 {offsets = [1, 0], sizes = [1, 256], strides = [1, 1]} : vector<2x256xf32> to vector<1x256xf32>
    %474 = vector.broadcast %472 : vector<1x1xf32> to vector<1x256xf32>
    %475 = arith.mulf %474, %473 : vector<1x256xf32>
    %476 = arith.addf %452, %475 : vector<1x256xf32>
    %477 = vector.extract_strided_slice %28 {offsets = [6, 0], sizes = [1, 256], strides = [1, 1]} : vector<9x256xf32> to vector<1x256xf32>
    %478 = vector.broadcast %477 : vector<1x256xf32> to vector<2x256xf32>
    %479 = arith.mulf %15, %478 : vector<2x256xf32>
    %cst_77 = arith.constant dense<0.000000e+00> : vector<2xf32>
    %480 = vector.multi_reduction <add>, %479, %cst_77 [1] : vector<2x256xf32> to vector<2xf32>
    %481 = vector.shape_cast %480 : vector<2xf32> to vector<2x1xf32>
    %482 = vector.extract_strided_slice %481 {offsets = [0, 0], sizes = [1, 1], strides = [1, 1]} : vector<2x1xf32> to vector<1x1xf32>
    %483 = vector.broadcast %19 : f32 to vector<1x1xf32>
    %484 = arith.mulf %483, %482 : vector<1x1xf32>
    %485 = vector.extract_strided_slice %481 {offsets = [1, 0], sizes = [1, 1], strides = [1, 1]} : vector<2x1xf32> to vector<1x1xf32>
    %486 = vector.broadcast %20 : f32 to vector<1x1xf32>
    %487 = arith.mulf %486, %485 : vector<1x1xf32>
    %488 = arith.addf %484, %487 : vector<1x1xf32>
    %489 = vector.broadcast %21 : f32 to vector<1x1xf32>
    %490 = arith.addf %488, %489 : vector<1x1xf32>
    %c0_78 = arith.constant 0 : index
    %c143 = arith.constant 143 : index
    %491 = vector.load %arg10[%c0_78, %c143] : memref<2x512xf32, #tpu.memory_space<vmem>>, vector<2x256xf32>
    %492 = vector.extract_strided_slice %29 {offsets = [0, 0], sizes = [1, 256], strides = [1, 1]} : vector<3x256xf32> to vector<1x256xf32>
    %493 = vector.broadcast %492 : vector<1x256xf32> to vector<2x256xf32>
    %494 = arith.mulf %491, %493 : vector<2x256xf32>
    %495 = vector.extract_strided_slice %26 {offsets = [6, 0], sizes = [1, 8], strides = [1, 1]} : vector<18x8xf32> to vector<1x8xf32>
    %496 = vector.extract_strided_slice %24 {offsets = [0, 0], sizes = [1, 8], strides = [1, 1]} : vector<2x8xf32> to vector<1x8xf32>
    %497 = vector.broadcast %490 : vector<1x1xf32> to vector<1x8xf32>
    %498 = arith.mulf %496, %497 : vector<1x8xf32>
    %499 = vector.extract_strided_slice %25 {offsets = [0, 0], sizes = [1, 8], strides = [1, 1]} : vector<2x8xf32> to vector<1x8xf32>
    %500 = arith.addf %498, %499 : vector<1x8xf32>
    %cst_79 = arith.constant dense<0xFF800000> : vector<1xf32>
    %501 = vector.multi_reduction <maximumf>, %500, %cst_79 [1] : vector<1x8xf32> to vector<1xf32>
    %502 = vector.shape_cast %501 : vector<1xf32> to vector<1x1xf32>
    %503 = vector.broadcast %502 : vector<1x1xf32> to vector<1x8xf32>
    %504 = arith.subf %500, %503 : vector<1x8xf32>
    %505 = math.exp %504 : vector<1x8xf32>
    %cst_80 = arith.constant dense<0.000000e+00> : vector<1xf32>
    %506 = vector.multi_reduction <add>, %505, %cst_80 [1] : vector<1x8xf32> to vector<1xf32>
    %507 = vector.shape_cast %506 : vector<1xf32> to vector<1x1xf32>
    %508 = vector.broadcast %507 : vector<1x1xf32> to vector<1x8xf32>
    %509 = arith.divf %505, %508 : vector<1x8xf32>
    %510 = arith.mulf %509, %495 : vector<1x8xf32>
    %cst_81 = arith.constant dense<0.000000e+00> : vector<1xf32>
    %511 = vector.multi_reduction <add>, %510, %cst_81 [1] : vector<1x8xf32> to vector<1xf32>
    %512 = vector.shape_cast %511 : vector<1xf32> to vector<1x1xf32>
    %513 = vector.broadcast %22 : f32 to vector<1x1xf32>
    %514 = arith.mulf %513, %512 : vector<1x1xf32>
    %515 = vector.extract_strided_slice %494 {offsets = [0, 0], sizes = [1, 256], strides = [1, 1]} : vector<2x256xf32> to vector<1x256xf32>
    %516 = vector.broadcast %514 : vector<1x1xf32> to vector<1x256xf32>
    %517 = arith.mulf %516, %515 : vector<1x256xf32>
    %518 = arith.addf %476, %517 : vector<1x256xf32>
    %519 = vector.extract_strided_slice %26 {offsets = [15, 0], sizes = [1, 8], strides = [1, 1]} : vector<18x8xf32> to vector<1x8xf32>
    %520 = vector.extract_strided_slice %24 {offsets = [1, 0], sizes = [1, 8], strides = [1, 1]} : vector<2x8xf32> to vector<1x8xf32>
    %521 = vector.broadcast %490 : vector<1x1xf32> to vector<1x8xf32>
    %522 = arith.mulf %520, %521 : vector<1x8xf32>
    %523 = vector.extract_strided_slice %25 {offsets = [1, 0], sizes = [1, 8], strides = [1, 1]} : vector<2x8xf32> to vector<1x8xf32>
    %524 = arith.addf %522, %523 : vector<1x8xf32>
    %cst_82 = arith.constant dense<0xFF800000> : vector<1xf32>
    %525 = vector.multi_reduction <maximumf>, %524, %cst_82 [1] : vector<1x8xf32> to vector<1xf32>
    %526 = vector.shape_cast %525 : vector<1xf32> to vector<1x1xf32>
    %527 = vector.broadcast %526 : vector<1x1xf32> to vector<1x8xf32>
    %528 = arith.subf %524, %527 : vector<1x8xf32>
    %529 = math.exp %528 : vector<1x8xf32>
    %cst_83 = arith.constant dense<0.000000e+00> : vector<1xf32>
    %530 = vector.multi_reduction <add>, %529, %cst_83 [1] : vector<1x8xf32> to vector<1xf32>
    %531 = vector.shape_cast %530 : vector<1xf32> to vector<1x1xf32>
    %532 = vector.broadcast %531 : vector<1x1xf32> to vector<1x8xf32>
    %533 = arith.divf %529, %532 : vector<1x8xf32>
    %534 = arith.mulf %533, %519 : vector<1x8xf32>
    %cst_84 = arith.constant dense<0.000000e+00> : vector<1xf32>
    %535 = vector.multi_reduction <add>, %534, %cst_84 [1] : vector<1x8xf32> to vector<1xf32>
    %536 = vector.shape_cast %535 : vector<1xf32> to vector<1x1xf32>
    %537 = vector.broadcast %23 : f32 to vector<1x1xf32>
    %538 = arith.mulf %537, %536 : vector<1x1xf32>
    %539 = vector.extract_strided_slice %494 {offsets = [1, 0], sizes = [1, 256], strides = [1, 1]} : vector<2x256xf32> to vector<1x256xf32>
    %540 = vector.broadcast %538 : vector<1x1xf32> to vector<1x256xf32>
    %541 = arith.mulf %540, %539 : vector<1x256xf32>
    %542 = arith.addf %518, %541 : vector<1x256xf32>
    %543 = vector.extract_strided_slice %28 {offsets = [7, 0], sizes = [1, 256], strides = [1, 1]} : vector<9x256xf32> to vector<1x256xf32>
    %544 = vector.broadcast %543 : vector<1x256xf32> to vector<2x256xf32>
    %545 = arith.mulf %15, %544 : vector<2x256xf32>
    %cst_85 = arith.constant dense<0.000000e+00> : vector<2xf32>
    %546 = vector.multi_reduction <add>, %545, %cst_85 [1] : vector<2x256xf32> to vector<2xf32>
    %547 = vector.shape_cast %546 : vector<2xf32> to vector<2x1xf32>
    %548 = vector.extract_strided_slice %547 {offsets = [0, 0], sizes = [1, 1], strides = [1, 1]} : vector<2x1xf32> to vector<1x1xf32>
    %549 = vector.broadcast %19 : f32 to vector<1x1xf32>
    %550 = arith.mulf %549, %548 : vector<1x1xf32>
    %551 = vector.extract_strided_slice %547 {offsets = [1, 0], sizes = [1, 1], strides = [1, 1]} : vector<2x1xf32> to vector<1x1xf32>
    %552 = vector.broadcast %20 : f32 to vector<1x1xf32>
    %553 = arith.mulf %552, %551 : vector<1x1xf32>
    %554 = arith.addf %550, %553 : vector<1x1xf32>
    %555 = vector.broadcast %21 : f32 to vector<1x1xf32>
    %556 = arith.addf %554, %555 : vector<1x1xf32>
    %c0_86 = arith.constant 0 : index
    %c144 = arith.constant 144 : index
    %557 = vector.load %arg10[%c0_86, %c144] : memref<2x512xf32, #tpu.memory_space<vmem>>, vector<2x256xf32>
    %558 = vector.extract_strided_slice %26 {offsets = [7, 0], sizes = [1, 8], strides = [1, 1]} : vector<18x8xf32> to vector<1x8xf32>
    %559 = vector.extract_strided_slice %24 {offsets = [0, 0], sizes = [1, 8], strides = [1, 1]} : vector<2x8xf32> to vector<1x8xf32>
    %560 = vector.broadcast %556 : vector<1x1xf32> to vector<1x8xf32>
    %561 = arith.mulf %559, %560 : vector<1x8xf32>
    %562 = vector.extract_strided_slice %25 {offsets = [0, 0], sizes = [1, 8], strides = [1, 1]} : vector<2x8xf32> to vector<1x8xf32>
    %563 = arith.addf %561, %562 : vector<1x8xf32>
    %cst_87 = arith.constant dense<0xFF800000> : vector<1xf32>
    %564 = vector.multi_reduction <maximumf>, %563, %cst_87 [1] : vector<1x8xf32> to vector<1xf32>
    %565 = vector.shape_cast %564 : vector<1xf32> to vector<1x1xf32>
    %566 = vector.broadcast %565 : vector<1x1xf32> to vector<1x8xf32>
    %567 = arith.subf %563, %566 : vector<1x8xf32>
    %568 = math.exp %567 : vector<1x8xf32>
    %cst_88 = arith.constant dense<0.000000e+00> : vector<1xf32>
    %569 = vector.multi_reduction <add>, %568, %cst_88 [1] : vector<1x8xf32> to vector<1xf32>
    %570 = vector.shape_cast %569 : vector<1xf32> to vector<1x1xf32>
    %571 = vector.broadcast %570 : vector<1x1xf32> to vector<1x8xf32>
    %572 = arith.divf %568, %571 : vector<1x8xf32>
    %573 = arith.mulf %572, %558 : vector<1x8xf32>
    %cst_89 = arith.constant dense<0.000000e+00> : vector<1xf32>
    %574 = vector.multi_reduction <add>, %573, %cst_89 [1] : vector<1x8xf32> to vector<1xf32>
    %575 = vector.shape_cast %574 : vector<1xf32> to vector<1x1xf32>
    %576 = vector.broadcast %22 : f32 to vector<1x1xf32>
    %577 = arith.mulf %576, %575 : vector<1x1xf32>
    %578 = vector.extract_strided_slice %557 {offsets = [0, 0], sizes = [1, 256], strides = [1, 1]} : vector<2x256xf32> to vector<1x256xf32>
    %579 = vector.broadcast %577 : vector<1x1xf32> to vector<1x256xf32>
    %580 = arith.mulf %579, %578 : vector<1x256xf32>
    %581 = arith.addf %542, %580 : vector<1x256xf32>
    %582 = vector.extract_strided_slice %26 {offsets = [16, 0], sizes = [1, 8], strides = [1, 1]} : vector<18x8xf32> to vector<1x8xf32>
    %583 = vector.extract_strided_slice %24 {offsets = [1, 0], sizes = [1, 8], strides = [1, 1]} : vector<2x8xf32> to vector<1x8xf32>
    %584 = vector.broadcast %556 : vector<1x1xf32> to vector<1x8xf32>
    %585 = arith.mulf %583, %584 : vector<1x8xf32>
    %586 = vector.extract_strided_slice %25 {offsets = [1, 0], sizes = [1, 8], strides = [1, 1]} : vector<2x8xf32> to vector<1x8xf32>
    %587 = arith.addf %585, %586 : vector<1x8xf32>
    %cst_90 = arith.constant dense<0xFF800000> : vector<1xf32>
    %588 = vector.multi_reduction <maximumf>, %587, %cst_90 [1] : vector<1x8xf32> to vector<1xf32>
    %589 = vector.shape_cast %588 : vector<1xf32> to vector<1x1xf32>
    %590 = vector.broadcast %589 : vector<1x1xf32> to vector<1x8xf32>
    %591 = arith.subf %587, %590 : vector<1x8xf32>
    %592 = math.exp %591 : vector<1x8xf32>
    %cst_91 = arith.constant dense<0.000000e+00> : vector<1xf32>
    %593 = vector.multi_reduction <add>, %592, %cst_91 [1] : vector<1x8xf32> to vector<1xf32>
    %594 = vector.shape_cast %593 : vector<1xf32> to vector<1x1xf32>
    %595 = vector.broadcast %594 : vector<1x1xf32> to vector<1x8xf32>
    %596 = arith.divf %592, %595 : vector<1x8xf32>
    %597 = arith.mulf %596, %582 : vector<1x8xf32>
    %cst_92 = arith.constant dense<0.000000e+00> : vector<1xf32>
    %598 = vector.multi_reduction <add>, %597, %cst_92 [1] : vector<1x8xf32> to vector<1xf32>
    %599 = vector.shape_cast %598 : vector<1xf32> to vector<1x1xf32>
    %600 = vector.broadcast %23 : f32 to vector<1x1xf32>
    %601 = arith.mulf %600, %599 : vector<1x1xf32>
    %602 = vector.extract_strided_slice %557 {offsets = [1, 0], sizes = [1, 256], strides = [1, 1]} : vector<2x256xf32> to vector<1x256xf32>
    %603 = vector.broadcast %601 : vector<1x1xf32> to vector<1x256xf32>
    %604 = arith.mulf %603, %602 : vector<1x256xf32>
    %605 = arith.addf %581, %604 : vector<1x256xf32>
    %606 = vector.extract_strided_slice %28 {offsets = [8, 0], sizes = [1, 256], strides = [1, 1]} : vector<9x256xf32> to vector<1x256xf32>
    %607 = vector.broadcast %606 : vector<1x256xf32> to vector<2x256xf32>
    %608 = arith.mulf %15, %607 : vector<2x256xf32>
    %cst_93 = arith.constant dense<0.000000e+00> : vector<2xf32>
    %609 = vector.multi_reduction <add>, %608, %cst_93 [1] : vector<2x256xf32> to vector<2xf32>
    %610 = vector.shape_cast %609 : vector<2xf32> to vector<2x1xf32>
    %611 = vector.extract_strided_slice %610 {offsets = [0, 0], sizes = [1, 1], strides = [1, 1]} : vector<2x1xf32> to vector<1x1xf32>
    %612 = vector.broadcast %19 : f32 to vector<1x1xf32>
    %613 = arith.mulf %612, %611 : vector<1x1xf32>
    %614 = vector.extract_strided_slice %610 {offsets = [1, 0], sizes = [1, 1], strides = [1, 1]} : vector<2x1xf32> to vector<1x1xf32>
    %615 = vector.broadcast %20 : f32 to vector<1x1xf32>
    %616 = arith.mulf %615, %614 : vector<1x1xf32>
    %617 = arith.addf %613, %616 : vector<1x1xf32>
    %618 = vector.broadcast %21 : f32 to vector<1x1xf32>
    %619 = arith.addf %617, %618 : vector<1x1xf32>
    %c0_94 = arith.constant 0 : index
    %c145 = arith.constant 145 : index
    %620 = vector.load %arg10[%c0_94, %c145] : memref<2x512xf32, #tpu.memory_space<vmem>>, vector<2x256xf32>
    %621 = vector.extract_strided_slice %29 {offsets = [2, 0], sizes = [1, 256], strides = [1, 1]} : vector<3x256xf32> to vector<1x256xf32>
    %622 = vector.broadcast %621 : vector<1x256xf32> to vector<2x256xf32>
    %623 = arith.mulf %620, %622 : vector<2x256xf32>
    %624 = vector.extract_strided_slice %26 {offsets = [8, 0], sizes = [1, 8], strides = [1, 1]} : vector<18x8xf32> to vector<1x8xf32>
    %625 = vector.extract_strided_slice %24 {offsets = [0, 0], sizes = [1, 8], strides = [1, 1]} : vector<2x8xf32> to vector<1x8xf32>
    %626 = vector.broadcast %619 : vector<1x1xf32> to vector<1x8xf32>
    %627 = arith.mulf %625, %626 : vector<1x8xf32>
    %628 = vector.extract_strided_slice %25 {offsets = [0, 0], sizes = [1, 8], strides = [1, 1]} : vector<2x8xf32> to vector<1x8xf32>
    %629 = arith.addf %627, %628 : vector<1x8xf32>
    %cst_95 = arith.constant dense<0xFF800000> : vector<1xf32>
    %630 = vector.multi_reduction <maximumf>, %629, %cst_95 [1] : vector<1x8xf32> to vector<1xf32>
    %631 = vector.shape_cast %630 : vector<1xf32> to vector<1x1xf32>
    %632 = vector.broadcast %631 : vector<1x1xf32> to vector<1x8xf32>
    %633 = arith.subf %629, %632 : vector<1x8xf32>
    %634 = math.exp %633 : vector<1x8xf32>
    %cst_96 = arith.constant dense<0.000000e+00> : vector<1xf32>
    %635 = vector.multi_reduction <add>, %634, %cst_96 [1] : vector<1x8xf32> to vector<1xf32>
    %636 = vector.shape_cast %635 : vector<1xf32> to vector<1x1xf32>
    %637 = vector.broadcast %636 : vector<1x1xf32> to vector<1x8xf32>
    %638 = arith.divf %634, %637 : vector<1x8xf32>
    %639 = arith.mulf %638, %624 : vector<1x8xf32>
    %cst_97 = arith.constant dense<0.000000e+00> : vector<1xf32>
    %640 = vector.multi_reduction <add>, %639, %cst_97 [1] : vector<1x8xf32> to vector<1xf32>
    %641 = vector.shape_cast %640 : vector<1xf32> to vector<1x1xf32>
    %642 = vector.broadcast %22 : f32 to vector<1x1xf32>
    %643 = arith.mulf %642, %641 : vector<1x1xf32>
    %644 = vector.extract_strided_slice %623 {offsets = [0, 0], sizes = [1, 256], strides = [1, 1]} : vector<2x256xf32> to vector<1x256xf32>
    %645 = vector.broadcast %643 : vector<1x1xf32> to vector<1x256xf32>
    %646 = arith.mulf %645, %644 : vector<1x256xf32>
    %647 = arith.addf %605, %646 : vector<1x256xf32>
    %648 = vector.extract_strided_slice %26 {offsets = [17, 0], sizes = [1, 8], strides = [1, 1]} : vector<18x8xf32> to vector<1x8xf32>
    %649 = vector.extract_strided_slice %24 {offsets = [1, 0], sizes = [1, 8], strides = [1, 1]} : vector<2x8xf32> to vector<1x8xf32>
    %650 = vector.broadcast %619 : vector<1x1xf32> to vector<1x8xf32>
    %651 = arith.mulf %649, %650 : vector<1x8xf32>
    %652 = vector.extract_strided_slice %25 {offsets = [1, 0], sizes = [1, 8], strides = [1, 1]} : vector<2x8xf32> to vector<1x8xf32>
    %653 = arith.addf %651, %652 : vector<1x8xf32>
    %cst_98 = arith.constant dense<0xFF800000> : vector<1xf32>
    %654 = vector.multi_reduction <maximumf>, %653, %cst_98 [1] : vector<1x8xf32> to vector<1xf32>
    %655 = vector.shape_cast %654 : vector<1xf32> to vector<1x1xf32>
    %656 = vector.broadcast %655 : vector<1x1xf32> to vector<1x8xf32>
    %657 = arith.subf %653, %656 : vector<1x8xf32>
    %658 = math.exp %657 : vector<1x8xf32>
    %cst_99 = arith.constant dense<0.000000e+00> : vector<1xf32>
    %659 = vector.multi_reduction <add>, %658, %cst_99 [1] : vector<1x8xf32> to vector<1xf32>
    %660 = vector.shape_cast %659 : vector<1xf32> to vector<1x1xf32>
    %661 = vector.broadcast %660 : vector<1x1xf32> to vector<1x8xf32>
    %662 = arith.divf %658, %661 : vector<1x8xf32>
    %663 = arith.mulf %662, %648 : vector<1x8xf32>
    %cst_100 = arith.constant dense<0.000000e+00> : vector<1xf32>
    %664 = vector.multi_reduction <add>, %663, %cst_100 [1] : vector<1x8xf32> to vector<1xf32>
    %665 = vector.shape_cast %664 : vector<1xf32> to vector<1x1xf32>
    %666 = vector.broadcast %23 : f32 to vector<1x1xf32>
    %667 = arith.mulf %666, %665 : vector<1x1xf32>
    %668 = vector.extract_strided_slice %623 {offsets = [1, 0], sizes = [1, 256], strides = [1, 1]} : vector<2x256xf32> to vector<1x256xf32>
    %669 = vector.broadcast %667 : vector<1x1xf32> to vector<1x256xf32>
    %670 = arith.mulf %669, %668 : vector<1x256xf32>
    %671 = arith.addf %647, %670 : vector<1x256xf32>
    %672 = arith.negf %671 : vector<1x256xf32>
    %673 = math.exp %672 : vector<1x256xf32>
    %cst_101 = arith.constant 1.000000e+00 : f32
    %674 = vector.broadcast %cst_101 : f32 to vector<1x256xf32>
    %675 = arith.addf %674, %673 : vector<1x256xf32>
    %676 = arith.divf %674, %675 : vector<1x256xf32>
    %677 = arith.mulf %671, %676 : vector<1x256xf32>
    %c0_102 = arith.constant 0 : index
    %c0_103 = arith.constant 0 : index
    %c0_104 = arith.constant 0 : index
    %678 = vector.load %arg9[%c0_102, %c0_103, %c0_104] : memref<1x1x256xf32, #tpu.memory_space<vmem>>, vector<1x1x256xf32>
    %679 = vector.shape_cast %678 : vector<1x1x256xf32> to vector<1x256xf32>
    %680 = vector.shape_cast %677 : vector<1x256xf32> to vector<1x1x256xf32>
    tpu.vector_store %arg9[%c0_102, %c0_103, %c0_104], %680 {strides = array<i32>} : memref<1x1x256xf32, #tpu.memory_space<vmem>>, vector<1x1x256xf32>,
    return
  }
  func.func @transform_0(%arg0: i32) -> (i32, i32, i32) {
    %c0_i32 = arith.constant 0 : i32
    %c0_i32_0 = arith.constant 0 : i32
    %c0_i32_1 = arith.constant 0 : i32
    return %arg0, %c0_i32, %c0_i32_0 : i32, i32, i32
  }
  func.func @transform_1(%arg0: i32) -> i32 {
    %c0_i32 = arith.constant 0 : i32
    %c0_i32_0 = arith.constant 0 : i32
    return %c0_i32 : i32
  }
  func.func @transform_2(%arg0: i32) -> (i32, i32) {
    %c0_i32 = arith.constant 0 : i32
    %c0_i32_0 = arith.constant 0 : i32
    %c0_i32_1 = arith.constant 0 : i32
    return %c0_i32, %c0_i32_0 : i32, i32
  }
  func.func @transform_3(%arg0: i32) -> (i32, i32) {
    %c0_i32 = arith.constant 0 : i32
    %c0_i32_0 = arith.constant 0 : i32
    %c0_i32_1 = arith.constant 0 : i32
    return %c0_i32, %c0_i32_0 : i32, i32
  }
  func.func @transform_4(%arg0: i32) -> (i32, i32) {
    %c0_i32 = arith.constant 0 : i32
    %c0_i32_0 = arith.constant 0 : i32
    %c0_i32_1 = arith.constant 0 : i32
    return %c0_i32, %c0_i32_0 : i32, i32
  }
  func.func @transform_5(%arg0: i32) -> (i32, i32) {
    %c0_i32 = arith.constant 0 : i32
    %c0_i32_0 = arith.constant 0 : i32
    %c0_i32_1 = arith.constant 0 : i32
    return %c0_i32, %c0_i32_0 : i32, i32
  }
  func.func @transform_6(%arg0: i32) -> (i32, i32) {
    %c0_i32 = arith.constant 0 : i32
    %c0_i32_0 = arith.constant 0 : i32
    %c0_i32_1 = arith.constant 0 : i32
    return %c0_i32, %c0_i32_0 : i32, i32
  }
  func.func @transform_7(%arg0: i32) -> (i32, i32) {
    %c0_i32 = arith.constant 0 : i32
    %c0_i32_0 = arith.constant 0 : i32
    %c0_i32_1 = arith.constant 0 : i32
    return %c0_i32, %c0_i32_0 : i32, i32
  }
  func.func @transform_8(%arg0: i32) -> (i32, i32, i32) {
    %c0_i32 = arith.constant 0 : i32
    %c0_i32_0 = arith.constant 0 : i32
    %c0_i32_1 = arith.constant 0 : i32
    return %arg0, %c0_i32, %c0_i32_0 : i32, i32, i32
  }
}

</mosaic_0001>

<llo_original>
// kernel: spatial_attention.1
$region0: #{spatial_attention.1}
  #allocation0 [shape = 'u32[]', space=smem, size = 0x4, offset = 0x4, fixed_abs, tag = 'smem constant byte address 0x4 - core index']
  #allocation1 [shape = 'u32[72,128]{1,0:T(1,128)}', space=vmem, size = 0x9000, scoped, tag = 'internal scratch']
  #allocation2 [shape = 'f32[2,512]{1,0:T(2,128)}', space=vmem, size = 0x1000, scoped, tag = 'scratch operand']
  %s0 = inlined_call_operand.vmem [shape: f32[2,4,256], index: 0, kind: input, shape index: {}]
  %s1 = inlined_call_operand.vmem [shape: f32[5], index: 1, kind: input, shape index: {}]
  %s2 = inlined_call_operand.vmem [shape: f32[2,8], index: 2, kind: input, shape index: {}]
  %s3 = inlined_call_operand.vmem [shape: f32[2,8], index: 3, kind: input, shape index: {}]
  %s4 = inlined_call_operand.vmem [shape: f32[18,8], index: 4, kind: input, shape index: {}]
  %s5 = inlined_call_operand.vmem [shape: f32[2,8], index: 5, kind: input, shape index: {}]
  %s6 = inlined_call_operand.vmem [shape: f32[9,256], index: 6, kind: input, shape index: {}]
  %s7 = inlined_call_operand.vmem [shape: f32[3,256], index: 7, kind: input, shape index: {}]
  %s8 = inlined_call_operand.vmem [shape: f32[2,1,256], index: 8, kind: output, shape index: {}]
  %s9 = sld [smem:[#allocation0]]
  $region69: #{spatial_attention.1} parent=0
    _
  %s11 = ssub.s32 1, %s9
  %s12 = scalar_select 0, %s11, %s9
  $region1: #{spatial_attention.1} parent=0
    #allocation3 [shape = 'u8[512]{0}', space=smem, size = 0x200, scoped, tag = 'input window, operand 1, single buffered']
    #allocation4 [shape = 's32[2]{0}', space=sflag, size = 0x8, scoped, tag = 'scoped memory for spatial_attention.1']
    %13 = vsyncpa [#allocation4], 0
    loop: start=0, step=1, limit=4
    $region2: #{spatial_attention.1} parent=1 // loop_pre_header
      _
    $region3: #{spatial_attention.1} parent=1 // loop_header
      %s15 = sphi 0, %s19
      %p16 = scmp.ge.s32.totalorder %s15, 4
      %s25 = sphi 0, %s27
      %s28 = sphi 0, %s25
      %s29 = sphi 0, %s28
      %s45 = sphi 0, %s29
      %s49 = sphi 0, %s49
      %s51 = sphi 0, %s49
      %s52 = sphi 0, %s51
      %s66 = sphi 0, %s52
      %s70 = sphi 0, %s70
      %s72 = sphi 0, %s70
      %s73 = sphi 0, %s72
      %s87 = sphi 0, %s73
      %s91 = sphi 0, %s91
      %s93 = sphi 0, %s91
      %s94 = sphi 0, %s93
      %s108 = sphi 0, %s94
      %s112 = sphi 0, %s112
      %s114 = sphi 0, %s112
      %s115 = sphi 0, %s114
      %s129 = sphi 0, %s115
      %s133 = sphi 0, %s133
      %s135 = sphi 0, %s133
      %s136 = sphi 0, %s135
      %s150 = sphi 0, %s136
      %s154 = sphi 0, %s154
      %s156 = sphi 0, %s154
      %s157 = sphi 0, %s156
      %s171 = sphi 0, %s157
      %s175 = sphi 0, %s175
      %s177 = sphi 0, %s175
      %s178 = sphi 0, %s177
      %s192 = sphi 0, %s178
      %s198 = sphi 0, %s200
      %s201 = sphi 0, %s198
      %s202 = sphi 0, %s201
      %s218 = sphi 0, %s202
    $region4: #{spatial_attention.1} parent=1 // loop_header_branch
      %18 = sbr.rel (%p16) target = $region8
    $region5: #{spatial_attention.1} parent=1 // loop_body
      %s20 = ssub.s32 %s15, 1
      %s21 = ssub.s32 %s15, 2
      %s22 = sadd.s32 %s15, 1
      %s23 = ssub.s32 %s15, %s22
      %p24 = scmp.eq.s32.totalorder %s23, 0
      %s26 = sadd.s32 %s25, 1
      %s27 = scalar_select %p24, %s25, %s26
      %p30 = pneg %p24
      %p31 = scmp.eq.s32.totalorder %s15, 1
      %p32 = por %p30, %p31
      %p33 = scmp.ne.s32.totalorder %s25, %s28
      %p34 = scmp.eq.s32.totalorder %s15, 0
      %p35 = por %p33, %p34
      %p36 = scmp.ne.s32.totalorder %s25, %s28
      %p37 = scmp.eq.s32.totalorder %s20, 1
      %p38 = por %p36, %p37
      %p39 = scmp.ne.s32.totalorder %s28, %s29
      %p40 = scmp.eq.s32.totalorder %s20, 0
      %p41 = por %p39, %p40
      %p42 = scmp.ne.s32.totalorder %s28, %s29
      %p43 = scmp.eq.s32.totalorder %s21, 1
      %p44 = por %p42, %p43
      %p46 = scmp.ne.s32.totalorder %s29, %s45
      %p47 = scmp.eq.s32.totalorder %s21, 0
      %p48 = por %p46, %p47
      %s50 = sadd.s32 %s49, 1
      %p53 = scmp.eq.s32.totalorder %s15, 1
      %p54 = scmp.ne.s32.totalorder %s49, %s51
      %p55 = scmp.eq.s32.totalorder %s15, 0
      %p56 = por %p54, %p55
      %p57 = scmp.ne.s32.totalorder %s49, %s51
      %p58 = scmp.eq.s32.totalorder %s20, 1
      %p59 = por %p57, %p58
      %p60 = scmp.ne.s32.totalorder %s51, %s52
      %p61 = scmp.eq.s32.totalorder %s20, 0
      %p62 = por %p60, %p61
      %p63 = scmp.ne.s32.totalorder %s51, %s52
      %p64 = scmp.eq.s32.totalorder %s21, 1
      %p65 = por %p63, %p64
      %p67 = scmp.ne.s32.totalorder %s52, %s66
      %p68 = scmp.eq.s32.totalorder %s21, 0
      %p69 = por %p67, %p68
      %s71 = sadd.s32 %s70, 1
      %p74 = scmp.eq.s32.totalorder %s15, 1
      %p75 = scmp.ne.s32.totalorder %s70, %s72
      %p76 = scmp.eq.s32.totalorder %s15, 0
      %p77 = por %p75, %p76
      %p78 = scmp.ne.s32.totalorder %s70, %s72
      %p79 = scmp.eq.s32.totalorder %s20, 1
      %p80 = por %p78, %p79
      %p81 = scmp.ne.s32.totalorder %s72, %s73
      %p82 = scmp.eq.s32.totalorder %s20, 0
      %p83 = por %p81, %p82
      %p84 = scmp.ne.s32.totalorder %s72, %s73
      %p85 = scmp.eq.s32.totalorder %s21, 1
      %p86 = por %p84, %p85
      %p88 = scmp.ne.s32.totalorder %s73, %s87
      %p89 = scmp.eq.s32.totalorder %s21, 0
      %p90 = por %p88, %p89
      %s92 = sadd.s32 %s91, 1
      %p95 = scmp.eq.s32.totalorder %s15, 1
      %p96 = scmp.ne.s32.totalorder %s91, %s93
      %p97 = scmp.eq.s32.totalorder %s15, 0
      %p98 = por %p96, %p97
      %p99 = scmp.ne.s32.totalorder %s91, %s93
      %p100 = scmp.eq.s32.totalorder %s20, 1
      %p101 = por %p99, %p100
      %p102 = scmp.ne.s32.totalorder %s93, %s94
      %p103 = scmp.eq.s32.totalorder %s20, 0
      %p104 = por %p102, %p103
      %p105 = scmp.ne.s32.totalorder %s93, %s94
      %p106 = scmp.eq.s32.totalorder %s21, 1
      %p107 = por %p105, %p106
      %p109 = scmp.ne.s32.totalorder %s94, %s108
      %p110 = scmp.eq.s32.totalorder %s21, 0
      %p111 = por %p109, %p110
      %s113 = sadd.s32 %s112, 1
      %p116 = scmp.eq.s32.totalorder %s15, 1
      %p117 = scmp.ne.s32.totalorder %s112, %s114
      %p118 = scmp.eq.s32.totalorder %s15, 0
      %p119 = por %p117, %p118
      %p120 = scmp.ne.s32.totalorder %s112, %s114
      %p121 = scmp.eq.s32.totalorder %s20, 1
      %p122 = por %p120, %p121
      %p123 = scmp.ne.s32.totalorder %s114, %s115
      %p124 = scmp.eq.s32.totalorder %s20, 0
      %p125 = por %p123, %p124
      %p126 = scmp.ne.s32.totalorder %s114, %s115
      %p127 = scmp.eq.s32.totalorder %s21, 1
      %p128 = por %p126, %p127
      %p130 = scmp.ne.s32.totalorder %s115, %s129
      %p131 = scmp.eq.s32.totalorder %s21, 0
      %p132 = por %p130, %p131
      %s134 = sadd.s32 %s133, 1
      %p137 = scmp.eq.s32.totalorder %s15, 1
      %p138 = scmp.ne.s32.totalorder %s133, %s135
      %p139 = scmp.eq.s32.totalorder %s15, 0
      %p140 = por %p138, %p139
      %p141 = scmp.ne.s32.totalorder %s133, %s135
      %p142 = scmp.eq.s32.totalorder %s20, 1
      %p143 = por %p141, %p142
      %p144 = scmp.ne.s32.totalorder %s135, %s136
      %p145 = scmp.eq.s32.totalorder %s20, 0
      %p146 = por %p144, %p145
      %p147 = scmp.ne.s32.totalorder %s135, %s136
      %p148 = scmp.eq.s32.totalorder %s21, 1
      %p149 = por %p147, %p148
      %p151 = scmp.ne.s32.totalorder %s136, %s150
      %p152 = scmp.eq.s32.totalorder %s21, 0
      %p153 = por %p151, %p152
      %s155 = sadd.s32 %s154, 1
      %p158 = scmp.eq.s32.totalorder %s15, 1
      %p159 = scmp.ne.s32.totalorder %s154, %s156
      %p160 = scmp.eq.s32.totalorder %s15, 0
      %p161 = por %p159, %p160
      %p162 = scmp.ne.s32.totalorder %s154, %s156
      %p163 = scmp.eq.s32.totalorder %s20, 1
      %p164 = por %p162, %p163
      %p165 = scmp.ne.s32.totalorder %s156, %s157
      %p166 = scmp.eq.s32.totalorder %s20, 0
      %p167 = por %p165, %p166
      %p168 = scmp.ne.s32.totalorder %s156, %s157
      %p169 = scmp.eq.s32.totalorder %s21, 1
      %p170 = por %p168, %p169
      %p172 = scmp.ne.s32.totalorder %s157, %s171
      %p173 = scmp.eq.s32.totalorder %s21, 0
      %p174 = por %p172, %p173
      %s176 = sadd.s32 %s175, 1
      %p179 = scmp.eq.s32.totalorder %s15, 1
      %p180 = scmp.ne.s32.totalorder %s175, %s177
      %p181 = scmp.eq.s32.totalorder %s15, 0
      %p182 = por %p180, %p181
      %p183 = scmp.ne.s32.totalorder %s175, %s177
      %p184 = scmp.eq.s32.totalorder %s20, 1
      %p185 = por %p183, %p184
      %p186 = scmp.ne.s32.totalorder %s177, %s178
      %p187 = scmp.eq.s32.totalorder %s20, 0
      %p188 = por %p186, %p187
      %p189 = scmp.ne.s32.totalorder %s177, %s178
      %p190 = scmp.eq.s32.totalorder %s21, 1
      %p191 = por %p189, %p190
      %p193 = scmp.ne.s32.totalorder %s178, %s192
      %p194 = scmp.eq.s32.totalorder %s21, 0
      %p195 = por %p193, %p194
      %s196 = ssub.s32 %s15, %s22
      %p197 = scmp.eq.s32.totalorder %s196, 0
      %s199 = sadd.s32 %s198, 1
      %s200 = scalar_select %p197, %s198, %s199
      %p203 = pneg %p197
      %p204 = scmp.eq.s32.totalorder %s15, 1
      %p205 = por %p203, %p204
      %p206 = scmp.ne.s32.totalorder %s198, %s201
      %p207 = scmp.eq.s32.totalorder %s15, 0
      %p208 = por %p206, %p207
      %p209 = scmp.ne.s32.totalorder %s198, %s201
      %p210 = scmp.eq.s32.totalorder %s20, 1
      %p211 = por %p209, %p210
      %p212 = scmp.ne.s32.totalorder %s201, %s202
      %p213 = scmp.eq.s32.totalorder %s20, 0
      %p214 = por %p212, %p213
      %p215 = scmp.ne.s32.totalorder %s201, %s202
      %p216 = scmp.eq.s32.totalorder %s21, 1
      %p217 = por %p215, %p216
      %p219 = scmp.ne.s32.totalorder %s202, %s218
      %p220 = scmp.eq.s32.totalorder %s21, 0
      %p221 = por %p219, %p220
      %p222 = scmp.le.s32.totalorder 1, %s15
      %p223 = scmp.lt.s32.totalorder %s15, 3
      %p224 = pnand %p222, %p223
      %p225 = pneg %p224
      // Predicated region
      $region9: #{spatial_attention.1} parent=5 // pred_check
        _
      $region10: #{spatial_attention.1} parent=5 // pred_check_branch
        %227 = sbr.rel (%p224) target = $region12
      $region11: #{spatial_attention.1} parent=5 // pred_region
        %s228 = ssub.s32 %s15, 1
        // Predicated region
        $region13: #{spatial_attention.1} parent=11 // pred_check
          %p229 = pneg %p62
        $region14: #{spatial_attention.1} parent=11 // pred_check_branch
          %231 = sbr.rel (%p229) target = $region16
        $region15: #{spatial_attention.1} parent=11 // pred_region
          %233 = vsyncadd [#allocation4], 0
          %s235 = sshll.u32 %s1, 4
          %s236 = int_to_ptr.vmem [resolvable:$true] %s235
          %238 = dma.vmem_to_smem %s236, 16, [#allocation3], [#allocation4]
        $region16: #{spatial_attention.1} parent=11 // pred_fallthru
          _
        // Predicated region
        $region17: #{spatial_attention.1} parent=11 // pred_check
          %p239 = pneg %p83
        $region18: #{spatial_attention.1} parent=11 // pred_check_branch
          %241 = sbr.rel (%p239) target = $region20
        $region19: #{spatial_attention.1} parent=11 // pred_region
          _
        $region20: #{spatial_attention.1} parent=11 // pred_fallthru
          _
        // Predicated region
        $region21: #{spatial_attention.1} parent=11 // pred_check
          %p242 = pneg %p104
        $region22: #{spatial_attention.1} parent=11 // pred_check_branch
          %244 = sbr.rel (%p242) target = $region24
        $region23: #{spatial_attention.1} parent=11 // pred_region
          _
        $region24: #{spatial_attention.1} parent=11 // pred_fallthru
          _
        // Predicated region
        $region25: #{spatial_attention.1} parent=11 // pred_check
          %p245 = pneg %p125
        $region26: #{spatial_attention.1} parent=11 // pred_check_branch
          %247 = sbr.rel (%p245) target = $region28
        $region27: #{spatial_attention.1} parent=11 // pred_region
          _
        $region28: #{spatial_attention.1} parent=11 // pred_fallthru
          _
        // Predicated region
        $region29: #{spatial_attention.1} parent=11 // pred_check
          %p248 = pneg %p146
        $region30: #{spatial_attention.1} parent=11 // pred_check_branch
          %250 = sbr.rel (%p248) target = $region32
        $region31: #{spatial_attention.1} parent=11 // pred_region
          _
        $region32: #{spatial_attention.1} parent=11 // pred_fallthru
          _
        // Predicated region
        $region33: #{spatial_attention.1} parent=11 // pred_check
          %p251 = pneg %p167
        $region34: #{spatial_attention.1} parent=11 // pred_check_branch
          %253 = sbr.rel (%p251) target = $region36
        $region35: #{spatial_attention.1} parent=11 // pred_region
          _
        $region36: #{spatial_attention.1} parent=11 // pred_fallthru
          _
        // Predicated region
        $region37: #{spatial_attention.1} parent=11 // pred_check
          %p254 = pneg %p188
        $region38: #{spatial_attention.1} parent=11 // pred_check_branch
          %256 = sbr.rel (%p254) target = $region40
        $region39: #{spatial_attention.1} parent=11 // pred_region
          _
        $region40: #{spatial_attention.1} parent=11 // pred_fallthru
          _
      $region12: #{spatial_attention.1} parent=5 // pred_fallthru
        _
      %p257 = scmp.lt.s32.totalorder %s15, 2
      // Predicated region
      $region41: #{spatial_attention.1} parent=5 // pred_check
        %p258 = pneg %p257
      $region42: #{spatial_attention.1} parent=5 // pred_check_branch
        %260 = sbr.rel (%p258) target = $region44
      $region43: #{spatial_attention.1} parent=5 // pred_region
        // Predicated region
        $region45: #{spatial_attention.1} parent=43 // pred_check
          %p261 = pneg %p35
        $region46: #{spatial_attention.1} parent=43 // pred_check_branch
          %263 = sbr.rel (%p261) target = $region48
        $region47: #{spatial_attention.1} parent=43 // pred_region
          %p264 = scmp.lt.s32.totalorder %s15, 1
          %s265 = scalar_select %p264, %s15, 1
          %s266 = smul.addr %s265, 2
          %s267 = smul.addr %s266, 4
          %s268 = scalar_lea.vmem %s0, %s267
        $region48: #{spatial_attention.1} parent=43 // pred_fallthru
          _
      $region44: #{spatial_attention.1} parent=5 // pred_fallthru
        _
      %p269 = scmp.le.s32.totalorder 1, %s15
      %p270 = scmp.lt.s32.totalorder %s15, 3
      %p271 = pnand %p269, %p270
      %p272 = pneg %p271
      // Predicated region
      $region49: #{spatial_attention.1} parent=5 // pred_check
        _
      $region50: #{spatial_attention.1} parent=5 // pred_check_branch
        %274 = sbr.rel (%p271) target = $region52
      $region51: #{spatial_attention.1} parent=5 // pred_region
        %s275 = ssub.s32 %s15, 1
        // Predicated region
        $region53: #{spatial_attention.1} parent=51 // pred_check
          %p276 = pneg %p62
        $region54: #{spatial_attention.1} parent=51 // pred_check_branch
          %278 = sbr.rel (%p276) target = $region56
        $region55: #{spatial_attention.1} parent=51 // pred_region
          %280 = dma.done [#allocation4], 16
        $region56: #{spatial_attention.1} parent=51 // pred_fallthru
          _
        %281 = sfence
        %p282 = scmp.lt.s32.totalorder %s20, 1
        %s283 = scalar_select %p282, %s20, 1
        %s284 = smul.addr %s283, 2
        %s285 = smul.addr %s284, 4
        %s286 = scalar_lea.vmem %s0, %s285
        %p287 = pneg %p41
        %p288 = pneg %p38
        %p289 = pneg %p62
        %p290 = pneg %p59
        %p291 = pneg %p83
        %p292 = pneg %p80
        %p293 = pneg %p104
        %p294 = pneg %p101
        %p295 = pneg %p125
        %p296 = pneg %p122
        %p297 = pneg %p146
        %p298 = pneg %p143
        %p299 = pneg %p167
        %p300 = pneg %p164
        %p301 = pneg %p188
        %p302 = pneg %p185
        %p303 = pneg %p214
        %p304 = pneg %p211
        %p305 = scmp.lt.s32.totalorder %s20, 1
        %s306 = scalar_select %p305, %s20, 1
        %s307 = smul.addr %s306, 2
        %s308 = scalar_lea.vmem %s8, %s307
        %p309 = scmp.lt.s32.totalorder %s20, 1
        %s310 = scalar_select %p309, %s20, 1
        %s311 = smul.addr %s310, 2
        %s312 = smul.addr %s311, 4
        %s313 = scalar_lea.vmem %s0, %s312
        %p314 = scmp.lt.s32.totalorder %s20, 1
        %s315 = scalar_select %p314, %s20, 1
        %s316 = smul.addr %s315, 2
        %s317 = scalar_lea.vmem %s8, %s316
        %v318 = vld [vmem:[%s313] sm:$0xff]
        %v320 = vrot.slane %v318, 5
        %v321 = vrot.slane %v320, 4
        %v323 = vadd.f32 %v318, %v321
        %v324 = vmax.f32 %v318, %v321
        %v325 = vrot.slane %v318, 6
        %v326 = vrot.slane %v325, 4
        %v328 = vadd.f32 %v323, %v326
        %v329 = vmax.f32 %v324, %v326
        %v330 = vrot.slane %v318, 7
        %v331 = vrot.slane %v330, 4
        %v333 = vadd.f32 %v328, %v331
        %v334 = vmax.f32 %v329, %v331
        %v335 = vmul.f32 %v333, 0.25
        %v337 = vperm.slane %v335, 0
        %v338 = vperm.slane %v335, 4
        %v342 = vperm.slane %v334, 0
        %v343 = vperm.slane %v334, 4
        %vm346 = vcmask 1040384
        %v347 = vsel %vm346, %v337, %v342
        %v348 = vsel %vm346, %v338, %v343
        %349 = vst [vmem:[#allocation2] sm:$0xff] 0.0
        %v352 = vrot.slane %v348, 6
        %vm353 = vcmask 1041408
        %v354 = vsel %vm353, %v347, %v352
        %356 = vst [vmem:[#allocation2 + $0x2] sm:$0xf] %v354
        %s357 = sld [smem:[#allocation3]]
        %s358 = sld [smem:[#allocation3 + $0x1]]
        %s359 = sld [smem:[#allocation3 + $0x2]]
        %s360 = sld [smem:[#allocation3 + $0x3]]
        %s361 = sld [smem:[#allocation3 + $0x4]]
        %v362 = vld [vmem:[%s2] sm:$0x3]
        %v363 = vld [vmem:[%s3] sm:$0x3]
        %v364 = vld [vmem:[%s4] sm:$0xff]
        %v365 = vld [vmem:[%s4 + $0x8] sm:$0xff]
        %v366 = vld [vmem:[%s4 + $0x10] sm:$0x3]
        %v367 = vld [vmem:[%s5] sm:$0x3]
        %v368 = vld [vmem:[%s6] sm:$0xff]
        %v369 = vld [vmem:[%s6 + $0x8] sm:$0xff]
        %v370 = vld [vmem:[%s6 + $0x10] sm:$0x1]
        %v371 = vld [vmem:[%s6 + $0x18] sm:$0x1]
        %v372 = vld [vmem:[%s7] sm:$0x77]
        %v373 = vsel %vm353, %v347, 0.0
        %v374 = vsel %vm353, %v348, 0.0
        %v375 = vadd.f32 %v373, %v374
        %376 = vadd.xlane.f32.xlu0 %v375
        %v377 = vpop.xlane.xlu0 %376
        %v378 = vrcp.pop 256.0
        %v379 = vmul.f32 256.0, %v378
        %v380 = vsub.f32 1.0, %v379
        %v381 = vmul.f32 %v378, %v380
        %v382 = vadd.f32 %v378, %v381
        %vm383 = vweird.f32 %v378
        %v384 = vsel %vm383, %v378, %v382
        %v385 = vmul.f32 %v377, %v384
        %v386 = vstv %s357
        %v387 = vmul.f32 %v386, %v385
        %v388 = vstv %s358
        %v389 = vmul.f32 %v388, %v385
        %v391 = vrot.slane %v389, 1
        %v393 = vadd.f32 %v387, %v391
        %v394 = vstv %s359
        %v395 = vadd.f32 %v393, %v394
        %397 = vset.pattern.permute.xlu0 0
        %398 = vperm.xlu0 %397, %v395
        %v399 = vpop.permute.xlu0 %398
        %v401 = vmul.f32 %v362, %v399
        %v402 = vadd.f32 %v401, %v363
        %vm403 = vcmask 57344
        %v404 = vsel %vm403, %v402, -inf
        %405 = vmax.xlane.f32.xlu0 %v404
        %v406 = vpop.xlane.xlu0 %405
        %v407 = vsub.f32 %v402, %v406
        %v408 = vmul.f32 %v407, 1.442695
        %v409 = vpow.pop %v408
        %v410 = vsel %vm403, %v409, 0.0
        %411 = vadd.xlane.f32.xlu0 %v410
        %v412 = vpop.xlane.xlu0 %411
        %v413 = vrcp.pop %v412
        %v414 = vmul.f32 %v412, %v413
        %v415 = vsub.f32 1.0, %v414
        %v416 = vmul.f32 %v413, %v415
        %v417 = vadd.f32 %v413, %v416
        %vm418 = vweird.f32 %v412
        %vm419 = vweird.f32 %v413
        %vm420 = vmor %vm418, %vm419
        %v421 = vsel %vm420, %v413, %v417
        %v422 = vand.u32 2147483647, %v412
        %vm423 = vcmp.eq.f32.partialorder %v422, 8.507059e+37
        %v424 = vand.u32 %v412, 2147483648
        %v425 = vor.u32 1.1754944e-38, %v424
        %v426 = vsel %vm423, %v425, %v421
        %v427 = vmul.f32 %v409, %v426
        %v428 = vmul.f32 %v427, %v367
        %v429 = vsel %vm403, %v428, 0.0
        %430 = vadd.xlane.f32.xlu0 %v429
        %v431 = vpop.xlane.xlu0 %430
        %v432 = vstv %s360
        %v433 = vmul.f32 %v432, %v431
        %v434 = vrot.slane %v399, 7
        %v436 = vmul.f32 %v362, %v434
        %v437 = vadd.f32 %v436, %v363
        %vm438 = vcmask 58369
        %v439 = vsel %vm438, %v437, -inf
        %440 = vmax.xlane.f32.xlu0 %v439
        %v441 = vpop.xlane.xlu0 %440
        %v442 = vsub.f32 %v437, %v441
        %v443 = vmul.f32 %v442, 1.442695
        %v444 = vpow.pop %v443
        %v445 = vsel %vm438, %v444, 0.0
        %446 = vadd.xlane.f32.xlu0 %v445
        %v447 = vpop.xlane.xlu0 %446
        %v448 = vrcp.pop %v447
        %v449 = vmul.f32 %v447, %v448
        %v450 = vsub.f32 1.0, %v449
        %v451 = vmul.f32 %v448, %v450
        %v452 = vadd.f32 %v448, %v451
        %vm453 = vweird.f32 %v447
        %vm454 = vweird.f32 %v448
        %vm455 = vmor %vm453, %vm454
        %v456 = vsel %vm455, %v448, %v452
        %v457 = vand.u32 2147483647, %v447
        %vm458 = vcmp.eq.f32.partialorder %v457, 8.507059e+37
        %v459 = vand.u32 %v447, 2147483648
        %v460 = vor.u32 1.1754944e-38, %v459
        %v461 = vsel %vm458, %v460, %v456
        %v462 = vmul.f32 %v444, %v461
        %v463 = vmul.f32 %v462, %v367
        %v464 = vsel %vm438, %v463, 0.0
        %465 = vadd.xlane.f32.xlu0 %v464
        %v466 = vpop.xlane.xlu0 %465
        %v467 = vstv %s361
        %v468 = vmul.f32 %v467, %v466
        %v470 = vrot.slane %v468, 1
        %v472 = vadd.f32 %v433, %v470
        %474 = vset.pattern.permute.xlu0 0
        %475 = vperm.xlu0 %474, %v472
        %v476 = vpop.permute.xlu0 %475
        %v478 = vadd.f32 %v476, 0.0
        %v479 = vperm.slane %v368, 0
        %v480 = vperm.slane %v369, 0
        %v481 = vmul.f32 %v347, %v479
        %v482 = vmul.f32 %v348, %v480
        %v483 = vsel %vm353, %v481, 0.0
        %v484 = vsel %vm353, %v482, 0.0
        %v485 = vadd.f32 %v483, %v484
        %486 = vadd.xlane.f32.xlu0 %v485
        %v487 = vpop.xlane.xlu0 %486
        %v488 = vmul.f32 %v386, %v487
        %v489 = vmul.f32 %v388, %v487
        %v491 = vrot.slane %v489, 1
        %v493 = vadd.f32 %v488, %v491
        %v494 = vadd.f32 %v493, %v394
        %v495 = vld [vmem:[#allocation2] sm:$0x3f]
        %v497 = vperm.slane %v372, 0
        %v498 = vperm.slane %v372, 4
        %v501 = vperm.slane %v497, 0
        %v502 = vperm.slane %v498, 0
        %v505 = vrot.slane %v502, 6
        %v506 = vsel %vm353, %v501, %v505
        %507 = vrot.lane.b32.xlu0 %v506, 111
        %v508 = vpop.permute.xlu0 %507
        %v509 = vrot.slane %v508, 6
        %vm510 = vcmask 908288
        %v511 = vsel %vm510, %v509, %v508
        %v513 = vmul.f32 %v495, %v511
        %515 = vset.pattern.permute.xlu0 0
        %516 = vperm.xlu0 %515, %v494
        %v517 = vpop.permute.xlu0 %516
        %v519 = vmul.f32 %v362, %v517
        %v520 = vadd.f32 %v519, %v363
        %v521 = vsel %vm403, %v520, -inf
        %522 = vmax.xlane.f32.xlu0 %v521
        %v523 = vpop.xlane.xlu0 %522
        %v524 = vsub.f32 %v520, %v523
        %v525 = vmul.f32 %v524, 1.442695
        %v526 = vpow.pop %v525
        %v527 = vsel %vm403, %v526, 0.0
        %528 = vadd.xlane.f32.xlu0 %v527
        %v529 = vpop.xlane.xlu0 %528
        %v530 = vrcp.pop %v529
        %v531 = vmul.f32 %v529, %v530
        %v532 = vsub.f32 1.0, %v531
        %v533 = vmul.f32 %v530, %v532
        %v534 = vadd.f32 %v530, %v533
        %vm535 = vweird.f32 %v529
        %vm536 = vweird.f32 %v530
        %vm537 = vmor %vm535, %vm536
        %v538 = vsel %vm537, %v530, %v534
        %v539 = vand.u32 2147483647, %v529
        %vm540 = vcmp.eq.f32.partialorder %v539, 8.507059e+37
        %v541 = vand.u32 %v529, 2147483648
        %v542 = vor.u32 1.1754944e-38, %v541
        %v543 = vsel %vm540, %v542, %v538
        %v544 = vmul.f32 %v526, %v543
        %v545 = vmul.f32 %v544, %v364
        %v546 = vsel %vm403, %v545, 0.0
        %547 = vadd.xlane.f32.xlu0 %v546
        %v548 = vpop.xlane.xlu0 %547
        %v549 = vmul.f32 %v432, %v548
        %v551 = vperm.slane %v513, 0
        %v552 = vperm.slane %v513, 2
        %v553 = vperm.slane %v513, 4
        %554 = vrot.lane.b32.xlu0 %v551, 17
        %v555 = vpop.permute.xlu0 %554
        %556 = vrot.lane.b32.xlu0 %v552, 17
        %v557 = vpop.permute.xlu0 %556
        %558 = vrot.lane.b32.xlu0 %v553, 17
        %v559 = vpop.permute.xlu0 %558
        %vm560 = vcmask 138240
        %v561 = vsel %vm560, %v555, %v557
        %v562 = vsel %vm560, %v557, %v559
        %v565 = vmul.f32 %v549, %v561
        %v566 = vmul.f32 %v549, %v562
        %v567 = vadd.f32 %v478, %v565
        %v568 = vadd.f32 %v478, %v566
        %v569 = vrot.slane %v517, 7
        %v571 = vmul.f32 %v362, %v569
        %v572 = vadd.f32 %v571, %v363
        %v573 = vsel %vm438, %v572, -inf
        %574 = vmax.xlane.f32.xlu0 %v573
        %v575 = vpop.xlane.xlu0 %574
        %v576 = vsub.f32 %v572, %v575
        %v577 = vmul.f32 %v576, 1.442695
        %v578 = vpow.pop %v577
        %v579 = vsel %vm438, %v578, 0.0
        %580 = vadd.xlane.f32.xlu0 %v579
        %v581 = vpop.xlane.xlu0 %580
        %v582 = vrcp.pop %v581
        %v583 = vmul.f32 %v581, %v582
        %v584 = vsub.f32 1.0, %v583
        %v585 = vmul.f32 %v582, %v584
        %v586 = vadd.f32 %v582, %v585
        %vm587 = vweird.f32 %v581
        %vm588 = vweird.f32 %v582
        %vm589 = vmor %vm587, %vm588
        %v590 = vsel %vm589, %v582, %v586
        %v591 = vand.u32 2147483647, %v581
        %vm592 = vcmp.eq.f32.partialorder %v591, 8.507059e+37
        %v593 = vand.u32 %v581, 2147483648
        %v594 = vor.u32 1.1754944e-38, %v593
        %v595 = vsel %vm592, %v594, %v590
        %v596 = vmul.f32 %v578, %v595
        %v597 = vmul.f32 %v596, %v365
        %v598 = vsel %vm438, %v597, 0.0
        %599 = vadd.xlane.f32.xlu0 %v598
        %v600 = vpop.xlane.xlu0 %599
        %v601 = vmul.f32 %v467, %v600
        %v602 = vperm.slane %v513, 1
        %v603 = vperm.slane %v513, 3
        %v604 = vperm.slane %v513, 5
        %605 = vrot.lane.b32.xlu0 %v602, 17
        %v606 = vpop.permute.xlu0 %605
        %607 = vrot.lane.b32.xlu0 %v603, 17
        %v608 = vpop.permute.xlu0 %607
        %609 = vrot.lane.b32.xlu0 %v604, 17
        %v610 = vpop.permute.xlu0 %609
        %v611 = vsel %vm560, %v606, %v608
        %v612 = vsel %vm560, %v608, %v610
        %v615 = vmul.f32 %v601, %v611
        %v616 = vmul.f32 %v601, %v612
        %v619 = vrot.slane %v615, 1
        %v620 = vrot.slane %v616, 1
        %v623 = vadd.f32 %v567, %v619
        %v624 = vadd.f32 %v568, %v620
        %v625 = vperm.slane %v368, 1
        %v626 = vperm.slane %v369, 1
        %v627 = vmul.f32 %v347, %v625
        %v628 = vmul.f32 %v348, %v626
        %v629 = vsel %vm353, %v627, 0.0
        %v630 = vsel %vm353, %v628, 0.0
        %v631 = vadd.f32 %v629, %v630
        %632 = vadd.xlane.f32.xlu0 %v631
        %v633 = vpop.xlane.xlu0 %632
        %v634 = vmul.f32 %v386, %v633
        %v635 = vmul.f32 %v388, %v633
        %v637 = vrot.slane %v635, 1
        %v639 = vadd.f32 %v634, %v637
        %v640 = vadd.f32 %v639, %v394
        %642 = vset.pattern.permute.xlu0 0
        %643 = vperm.xlu0 %642, %v640
        %v644 = vpop.permute.xlu0 %643
        %v646 = vmul.f32 %v362, %v644
        %v647 = vadd.f32 %v646, %v363
        %v648 = vsel %vm403, %v647, -inf
        %649 = vmax.xlane.f32.xlu0 %v648
        %v650 = vpop.xlane.xlu0 %649
        %v651 = vsub.f32 %v647, %v650
        %v652 = vmul.f32 %v651, 1.442695
        %v653 = vpow.pop %v652
        %v654 = vsel %vm403, %v653, 0.0
        %655 = vadd.xlane.f32.xlu0 %v654
        %v656 = vpop.xlane.xlu0 %655
        %v657 = vrcp.pop %v656
        %v658 = vmul.f32 %v656, %v657
        %v659 = vsub.f32 1.0, %v658
        %v660 = vmul.f32 %v657, %v659
        %v661 = vadd.f32 %v657, %v660
        %vm662 = vweird.f32 %v656
        %vm663 = vweird.f32 %v657
        %vm664 = vmor %vm662, %vm663
        %v665 = vsel %vm664, %v657, %v661
        %v666 = vand.u32 2147483647, %v656
        %vm667 = vcmp.eq.f32.partialorder %v666, 8.507059e+37
        %v668 = vand.u32 %v656, 2147483648
        %v669 = vor.u32 1.1754944e-38, %v668
        %v670 = vsel %vm667, %v669, %v665
        %v671 = vmul.f32 %v653, %v670
        %v673 = vrot.slane %v364, 1
        %v675 = vmul.f32 %v671, %v673
        %v676 = vsel %vm403, %v675, 0.0
        %677 = vadd.xlane.f32.xlu0 %v676
        %v678 = vpop.xlane.xlu0 %677
        %v679 = vmul.f32 %v432, %v678
        %v681 = vperm.slane %v495, 0
        %v682 = vperm.slane %v495, 2
        %v683 = vperm.slane %v495, 4
        %684 = vrot.lane.b32.xlu0 %v681, 16
        %v685 = vpop.permute.xlu0 %684
        %686 = vrot.lane.b32.xlu0 %v682, 16
        %v687 = vpop.permute.xlu0 %686
        %688 = vrot.lane.b32.xlu0 %v683, 16
        %v689 = vpop.permute.xlu0 %688
        %vm690 = vcmask 130048
        %v691 = vsel %vm690, %v685, %v687
        %v692 = vsel %vm690, %v687, %v689
        %v695 = vmul.f32 %v679, %v691
        %v696 = vmul.f32 %v679, %v692
        %v697 = vadd.f32 %v623, %v695
        %v698 = vadd.f32 %v624, %v696
        %v699 = vrot.slane %v644, 7
        %v701 = vmul.f32 %v362, %v699
        %v702 = vadd.f32 %v701, %v363
        %v703 = vsel %vm438, %v702, -inf
        %704 = vmax.xlane.f32.xlu0 %v703
        %v705 = vpop.xlane.xlu0 %704
        %v706 = vsub.f32 %v702, %v705
        %v707 = vmul.f32 %v706, 1.442695
        %v708 = vpow.pop %v707
        %v709 = vsel %vm438, %v708, 0.0
        %710 = vadd.xlane.f32.xlu0 %v709
        %v711 = vpop.xlane.xlu0 %710
        %v712 = vrcp.pop %v711
        %v713 = vmul.f32 %v711, %v712
        %v714 = vsub.f32 1.0, %v713
        %v715 = vmul.f32 %v712, %v714
        %v716 = vadd.f32 %v712, %v715
        %vm717 = vweird.f32 %v711
        %vm718 = vweird.f32 %v712
        %vm719 = vmor %vm717, %vm718
        %v720 = vsel %vm719, %v712, %v716
        %v721 = vand.u32 2147483647, %v711
        %vm722 = vcmp.eq.f32.partialorder %v721, 8.507059e+37
        %v723 = vand.u32 %v711, 2147483648
        %v724 = vor.u32 1.1754944e-38, %v723
        %v725 = vsel %vm722, %v724, %v720
        %v726 = vmul.f32 %v708, %v725
        %v728 = vrot.slane %v365, 1
        %v730 = vmul.f32 %v726, %v728
        %v731 = vsel %vm438, %v730, 0.0
        %732 = vadd.xlane.f32.xlu0 %v731
        %v733 = vpop.xlane.xlu0 %732
        %v734 = vmul.f32 %v467, %v733
        %v735 = vperm.slane %v495, 1
        %v736 = vperm.slane %v495, 3
        %v737 = vperm.slane %v495, 5
        %738 = vrot.lane.b32.xlu0 %v735, 16
        %v739 = vpop.permute.xlu0 %738
        %740 = vrot.lane.b32.xlu0 %v736, 16
        %v741 = vpop.permute.xlu0 %740
        %742 = vrot.lane.b32.xlu0 %v737, 16
        %v743 = vpop.permute.xlu0 %742
        %v744 = vsel %vm690, %v739, %v741
        %v745 = vsel %vm690, %v741, %v743
        %v748 = vmul.f32 %v734, %v744
        %v749 = vmul.f32 %v734, %v745
        %v752 = vrot.slane %v748, 1
        %v753 = vrot.slane %v749, 1
        %v756 = vadd.f32 %v697, %v752
        %v757 = vadd.f32 %v698, %v753
        %v758 = vperm.slane %v368, 2
        %v759 = vperm.slane %v369, 2
        %v760 = vmul.f32 %v347, %v758
        %v761 = vmul.f32 %v348, %v759
        %v762 = vsel %vm353, %v760, 0.0
        %v763 = vsel %vm353, %v761, 0.0
        %v764 = vadd.f32 %v762, %v763
        %765 = vadd.xlane.f32.xlu0 %v764
        %v766 = vpop.xlane.xlu0 %765
        %v767 = vmul.f32 %v386, %v766
        %v768 = vmul.f32 %v388, %v766
        %v770 = vrot.slane %v768, 1
        %v772 = vadd.f32 %v767, %v770
        %v773 = vadd.f32 %v772, %v394
        %v774 = vperm.slane %v372, 2
        %v775 = vperm.slane %v372, 6
        %v778 = vperm.slane %v774, 2
        %v779 = vperm.slane %v775, 2
        %v782 = vrot.slane %v779, 6
        %v783 = vsel %vm353, %v778, %v782
        %784 = vrot.lane.b32.xlu0 %v783, 113
        %v785 = vpop.permute.xlu0 %784
        %v786 = vrot.slane %v785, 6
        %vm787 = vcmask 924672
        %v788 = vsel %vm787, %v786, %v785
        %v790 = vmul.f32 %v495, %v788
        %792 = vset.pattern.permute.xlu0 0
        %793 = vperm.xlu0 %792, %v773
        %v794 = vpop.permute.xlu0 %793
        %v796 = vmul.f32 %v362, %v794
        %v797 = vadd.f32 %v796, %v363
        %v798 = vsel %vm403, %v797, -inf
        %799 = vmax.xlane.f32.xlu0 %v798
        %v800 = vpop.xlane.xlu0 %799
        %v801 = vsub.f32 %v797, %v800
        %v802 = vmul.f32 %v801, 1.442695
        %v803 = vpow.pop %v802
        %v804 = vsel %vm403, %v803, 0.0
        %805 = vadd.xlane.f32.xlu0 %v804
        %v806 = vpop.xlane.xlu0 %805
        %v807 = vrcp.pop %v806
        %v808 = vmul.f32 %v806, %v807
        %v809 = vsub.f32 1.0, %v808
        %v810 = vmul.f32 %v807, %v809
        %v811 = vadd.f32 %v807, %v810
        %vm812 = vweird.f32 %v806
        %vm813 = vweird.f32 %v807
        %vm814 = vmor %vm812, %vm813
        %v815 = vsel %vm814, %v807, %v811
        %v816 = vand.u32 2147483647, %v806
        %vm817 = vcmp.eq.f32.partialorder %v816, 8.507059e+37
        %v818 = vand.u32 %v806, 2147483648
        %v819 = vor.u32 1.1754944e-38, %v818
        %v820 = vsel %vm817, %v819, %v815
        %v821 = vmul.f32 %v803, %v820
        %v822 = vrot.slane %v364, 2
        %v824 = vmul.f32 %v821, %v822
        %v825 = vsel %vm403, %v824, 0.0
        %826 = vadd.xlane.f32.xlu0 %v825
        %v827 = vpop.xlane.xlu0 %826
        %v828 = vmul.f32 %v432, %v827
        %v830 = vperm.slane %v790, 0
        %v831 = vperm.slane %v790, 2
        %v832 = vperm.slane %v790, 4
        %833 = vrot.lane.b32.xlu0 %v830, 15
        %v834 = vpop.permute.xlu0 %833
        %835 = vrot.lane.b32.xlu0 %v831, 15
        %v836 = vpop.permute.xlu0 %835
        %837 = vrot.lane.b32.xlu0 %v832, 15
        %v838 = vpop.permute.xlu0 %837
        %vm839 = vcmask 121856
        %v840 = vsel %vm839, %v834, %v836
        %v841 = vsel %vm839, %v836, %v838
        %v844 = vmul.f32 %v828, %v840
        %v845 = vmul.f32 %v828, %v841
        %v846 = vadd.f32 %v756, %v844
        %v847 = vadd.f32 %v757, %v845
        %v848 = vrot.slane %v794, 7
        %v850 = vmul.f32 %v362, %v848
        %v851 = vadd.f32 %v850, %v363
        %v852 = vsel %vm438, %v851, -inf
        %853 = vmax.xlane.f32.xlu0 %v852
        %v854 = vpop.xlane.xlu0 %853
        %v855 = vsub.f32 %v851, %v854
        %v856 = vmul.f32 %v855, 1.442695
        %v857 = vpow.pop %v856
        %v858 = vsel %vm438, %v857, 0.0
        %859 = vadd.xlane.f32.xlu0 %v858
        %v860 = vpop.xlane.xlu0 %859
        %v861 = vrcp.pop %v860
        %v862 = vmul.f32 %v860, %v861
        %v863 = vsub.f32 1.0, %v862
        %v864 = vmul.f32 %v861, %v863
        %v865 = vadd.f32 %v861, %v864
        %vm866 = vweird.f32 %v860
        %vm867 = vweird.f32 %v861
        %vm868 = vmor %vm866, %vm867
        %v869 = vsel %vm868, %v861, %v865
        %v870 = vand.u32 2147483647, %v860
        %vm871 = vcmp.eq.f32.partialorder %v870, 8.507059e+37
        %v872 = vand.u32 %v860, 2147483648
        %v873 = vor.u32 1.1754944e-38, %v872
        %v874 = vsel %vm871, %v873, %v869
        %v875 = vmul.f32 %v857, %v874
        %v876 = vrot.slane %v365, 2
        %v878 = vmul.f32 %v875, %v876
        %v879 = vsel %vm438, %v878, 0.0
        %880 = vadd.xlane.f32.xlu0 %v879
        %v881 = vpop.xlane.xlu0 %880
        %v882 = vmul.f32 %v467, %v881
        %v883 = vperm.slane %v790, 1
        %v884 = vperm.slane %v790, 3
        %v885 = vperm.slane %v790, 5
        %886 = vrot.lane.b32.xlu0 %v883, 15
        %v887 = vpop.permute.xlu0 %886
        %888 = vrot.lane.b32.xlu0 %v884, 15
        %v889 = vpop.permute.xlu0 %888
        %890 = vrot.lane.b32.xlu0 %v885, 15
        %v891 = vpop.permute.xlu0 %890
        %v892 = vsel %vm839, %v887, %v889
        %v893 = vsel %vm839, %v889, %v891
        %v896 = vmul.f32 %v882, %v892
        %v897 = vmul.f32 %v882, %v893
        %v900 = vrot.slane %v896, 1
        %v901 = vrot.slane %v897, 1
        %v904 = vadd.f32 %v846, %v900
        %v905 = vadd.f32 %v847, %v901
        %v906 = vperm.slane %v368, 3
        %v907 = vperm.slane %v369, 3
        %v908 = vmul.f32 %v347, %v906
        %v909 = vmul.f32 %v348, %v907
        %v910 = vsel %vm353, %v908, 0.0
        %v911 = vsel %vm353, %v909, 0.0
        %v912 = vadd.f32 %v910, %v911
        %913 = vadd.xlane.f32.xlu0 %v912
        %v914 = vpop.xlane.xlu0 %913
        %v915 = vmul.f32 %v386, %v914
        %v916 = vmul.f32 %v388, %v914
        %v918 = vrot.slane %v916, 1
        %v920 = vadd.f32 %v915, %v918
        %v921 = vadd.f32 %v920, %v394
        %922 = vrot.lane.b32.xlu0 %v506, 127
        %v923 = vpop.permute.xlu0 %922
        %v924 = vrot.slane %v923, 6
        %vm925 = vcmask 1039360
        %v926 = vsel %vm925, %v924, %v923
        %v928 = vmul.f32 %v495, %v926
        %930 = vset.pattern.permute.xlu0 0
        %931 = vperm.xlu0 %930, %v921
        %v932 = vpop.permute.xlu0 %931
        %v934 = vmul.f32 %v362, %v932
        %v935 = vadd.f32 %v934, %v363
        %v936 = vsel %vm403, %v935, -inf
        %937 = vmax.xlane.f32.xlu0 %v936
        %v938 = vpop.xlane.xlu0 %937
        %v939 = vsub.f32 %v935, %v938
        %v940 = vmul.f32 %v939, 1.442695
        %v941 = vpow.pop %v940
        %v942 = vsel %vm403, %v941, 0.0
        %943 = vadd.xlane.f32.xlu0 %v942
        %v944 = vpop.xlane.xlu0 %943
        %v945 = vrcp.pop %v944
        %v946 = vmul.f32 %v944, %v945
        %v947 = vsub.f32 1.0, %v946
        %v948 = vmul.f32 %v945, %v947
        %v949 = vadd.f32 %v945, %v948
        %vm950 = vweird.f32 %v944
        %vm951 = vweird.f32 %v945
        %vm952 = vmor %vm950, %vm951
        %v953 = vsel %vm952, %v945, %v949
        %v954 = vand.u32 2147483647, %v944
        %vm955 = vcmp.eq.f32.partialorder %v954, 8.507059e+37
        %v956 = vand.u32 %v944, 2147483648
        %v957 = vor.u32 1.1754944e-38, %v956
        %v958 = vsel %vm955, %v957, %v953
        %v959 = vmul.f32 %v941, %v958
        %v960 = vrot.slane %v364, 3
        %v962 = vmul.f32 %v959, %v960
        %v963 = vsel %vm403, %v962, 0.0
        %964 = vadd.xlane.f32.xlu0 %v963
        %v965 = vpop.xlane.xlu0 %964
        %v966 = vmul.f32 %v432, %v965
        %v968 = vperm.slane %v928, 0
        %v969 = vperm.slane %v928, 2
        %v970 = vperm.slane %v928, 4
        %971 = vrot.lane.b32.xlu0 %v968, 1
        %v972 = vpop.permute.xlu0 %971
        %973 = vrot.lane.b32.xlu0 %v969, 1
        %v974 = vpop.permute.xlu0 %973
        %975 = vrot.lane.b32.xlu0 %v970, 1
        %v976 = vpop.permute.xlu0 %975
        %vm977 = vcmask 7168
        %v978 = vsel %vm977, %v972, %v974
        %v979 = vsel %vm977, %v974, %v976
        %v982 = vmul.f32 %v966, %v978
        %v983 = vmul.f32 %v966, %v979
        %v984 = vadd.f32 %v904, %v982
        %v985 = vadd.f32 %v905, %v983
        %v986 = vrot.slane %v932, 7
        %v988 = vmul.f32 %v362, %v986
        %v989 = vadd.f32 %v988, %v363
        %v990 = vsel %vm438, %v989, -inf
        %991 = vmax.xlane.f32.xlu0 %v990
        %v992 = vpop.xlane.xlu0 %991
        %v993 = vsub.f32 %v989, %v992
        %v994 = vmul.f32 %v993, 1.442695
        %v995 = vpow.pop %v994
        %v996 = vsel %vm438, %v995, 0.0
        %997 = vadd.xlane.f32.xlu0 %v996
        %v998 = vpop.xlane.xlu0 %997
        %v999 = vrcp.pop %v998
        %v1000 = vmul.f32 %v998, %v999
        %v1001 = vsub.f32 1.0, %v1000
        %v1002 = vmul.f32 %v999, %v1001
        %v1003 = vadd.f32 %v999, %v1002
        %vm1004 = vweird.f32 %v998
        %vm1005 = vweird.f32 %v999
        %vm1006 = vmor %vm1004, %vm1005
        %v1007 = vsel %vm1006, %v999, %v1003
        %v1008 = vand.u32 2147483647, %v998
        %vm1009 = vcmp.eq.f32.partialorder %v1008, 8.507059e+37
        %v1010 = vand.u32 %v998, 2147483648
        %v1011 = vor.u32 1.1754944e-38, %v1010
        %v1012 = vsel %vm1009, %v1011, %v1007
        %v1013 = vmul.f32 %v995, %v1012
        %v1014 = vrot.slane %v365, 3
        %v1016 = vmul.f32 %v1013, %v1014
        %v1017 = vsel %vm438, %v1016, 0.0
        %1018 = vadd.xlane.f32.xlu0 %v1017
        %v1019 = vpop.xlane.xlu0 %1018
        %v1020 = vmul.f32 %v467, %v1019
        %v1021 = vperm.slane %v928, 1
        %v1022 = vperm.slane %v928, 3
        %v1023 = vperm.slane %v928, 5
        %1024 = vrot.lane.b32.xlu0 %v1021, 1
        %v1025 = vpop.permute.xlu0 %1024
        %1026 = vrot.lane.b32.xlu0 %v1022, 1
        %v1027 = vpop.permute.xlu0 %1026
        %1028 = vrot.lane.b32.xlu0 %v1023, 1
        %v1029 = vpop.permute.xlu0 %1028
        %v1030 = vsel %vm977, %v1025, %v1027
        %v1031 = vsel %vm977, %v1027, %v1029
        %v1034 = vmul.f32 %v1020, %v1030
        %v1035 = vmul.f32 %v1020, %v1031
        %v1038 = vrot.slane %v1034, 1
        %v1039 = vrot.slane %v1035, 1
        %v1042 = vadd.f32 %v984, %v1038
        %v1043 = vadd.f32 %v985, %v1039
        %v1044 = vperm.slane %v368, 4
        %v1045 = vperm.slane %v369, 4
        %v1046 = vmul.f32 %v347, %v1044
        %v1047 = vmul.f32 %v348, %v1045
        %v1048 = vsel %vm353, %v1046, 0.0
        %v1049 = vsel %vm353, %v1047, 0.0
        %v1050 = vadd.f32 %v1048, %v1049
        %1051 = vadd.xlane.f32.xlu0 %v1050
        %v1052 = vpop.xlane.xlu0 %1051
        %v1053 = vmul.f32 %v386, %v1052
        %v1054 = vmul.f32 %v388, %v1052
        %v1056 = vrot.slane %v1054, 1
        %v1058 = vadd.f32 %v1053, %v1056
        %v1059 = vadd.f32 %v1058, %v394
        %v1060 = vld [vmem:[#allocation2 + $0x2] sm:$0xf]
        %1062 = vset.pattern.permute.xlu0 0
        %1063 = vperm.xlu0 %1062, %v1059
        %v1064 = vpop.permute.xlu0 %1063
        %v1066 = vmul.f32 %v362, %v1064
        %v1067 = vadd.f32 %v1066, %v363
        %v1068 = vsel %vm403, %v1067, -inf
        %1069 = vmax.xlane.f32.xlu0 %v1068
        %v1070 = vpop.xlane.xlu0 %1069
        %v1071 = vsub.f32 %v1067, %v1070
        %v1072 = vmul.f32 %v1071, 1.442695
        %v1073 = vpow.pop %v1072
        %v1074 = vsel %vm403, %v1073, 0.0
        %1075 = vadd.xlane.f32.xlu0 %v1074
        %v1076 = vpop.xlane.xlu0 %1075
        %v1077 = vrcp.pop %v1076
        %v1078 = vmul.f32 %v1076, %v1077
        %v1079 = vsub.f32 1.0, %v1078
        %v1080 = vmul.f32 %v1077, %v1079
        %v1081 = vadd.f32 %v1077, %v1080
        %vm1082 = vweird.f32 %v1076
        %vm1083 = vweird.f32 %v1077
        %vm1084 = vmor %vm1082, %vm1083
        %v1085 = vsel %vm1084, %v1077, %v1081
        %v1086 = vand.u32 2147483647, %v1076
        %vm1087 = vcmp.eq.f32.partialorder %v1086, 8.507059e+37
        %v1088 = vand.u32 %v1076, 2147483648
        %v1089 = vor.u32 1.1754944e-38, %v1088
        %v1090 = vsel %vm1087, %v1089, %v1085
        %v1091 = vmul.f32 %v1073, %v1090
        %v1092 = vrot.slane %v364, 4
        %v1094 = vmul.f32 %v1091, %v1092
        %v1095 = vsel %vm403, %v1094, 0.0
        %1096 = vadd.xlane.f32.xlu0 %v1095
        %v1097 = vpop.xlane.xlu0 %1096
        %v1098 = vmul.f32 %v432, %v1097
        %v1100 = vperm.slane %v1060, 0
        %v1101 = vperm.slane %v1060, 2
        %v1104 = vmul.f32 %v1098, %v1100
        %v1105 = vmul.f32 %v1098, %v1101
        %v1106 = vadd.f32 %v1042, %v1104
        %v1107 = vadd.f32 %v1043, %v1105
        %v1108 = vrot.slane %v1064, 7
        %v1110 = vmul.f32 %v362, %v1108
        %v1111 = vadd.f32 %v1110, %v363
        %v1112 = vsel %vm438, %v1111, -inf
        %1113 = vmax.xlane.f32.xlu0 %v1112
        %v1114 = vpop.xlane.xlu0 %1113
        %v1115 = vsub.f32 %v1111, %v1114
        %v1116 = vmul.f32 %v1115, 1.442695
        %v1117 = vpow.pop %v1116
        %v1118 = vsel %vm438, %v1117, 0.0
        %1119 = vadd.xlane.f32.xlu0 %v1118
        %v1120 = vpop.xlane.xlu0 %1119
        %v1121 = vrcp.pop %v1120
        %v1122 = vmul.f32 %v1120, %v1121
        %v1123 = vsub.f32 1.0, %v1122
        %v1124 = vmul.f32 %v1121, %v1123
        %v1125 = vadd.f32 %v1121, %v1124
        %vm1126 = vweird.f32 %v1120
        %vm1127 = vweird.f32 %v1121
        %vm1128 = vmor %vm1126, %vm1127
        %v1129 = vsel %vm1128, %v1121, %v1125
        %v1130 = vand.u32 2147483647, %v1120
        %vm1131 = vcmp.eq.f32.partialorder %v1130, 8.507059e+37
        %v1132 = vand.u32 %v1120, 2147483648
        %v1133 = vor.u32 1.1754944e-38, %v1132
        %v1134 = vsel %vm1131, %v1133, %v1129
        %v1135 = vmul.f32 %v1117, %v1134
        %v1136 = vrot.slane %v365, 4
        %v1138 = vmul.f32 %v1135, %v1136
        %v1139 = vsel %vm438, %v1138, 0.0
        %1140 = vadd.xlane.f32.xlu0 %v1139
        %v1141 = vpop.xlane.xlu0 %1140
        %v1142 = vmul.f32 %v467, %v1141
        %v1143 = vperm.slane %v1060, 1
        %v1144 = vperm.slane %v1060, 3
        %v1147 = vmul.f32 %v1142, %v1143
        %v1148 = vmul.f32 %v1142, %v1144
        %v1151 = vrot.slane %v1147, 1
        %v1152 = vrot.slane %v1148, 1
        %v1155 = vadd.f32 %v1106, %v1151
        %v1156 = vadd.f32 %v1107, %v1152
        %v1157 = vperm.slane %v368, 5
        %v1158 = vperm.slane %v369, 5
        %v1159 = vmul.f32 %v347, %v1157
        %v1160 = vmul.f32 %v348, %v1158
        %v1161 = vsel %vm353, %v1159, 0.0
        %v1162 = vsel %vm353, %v1160, 0.0
        %v1163 = vadd.f32 %v1161, %v1162
        %1164 = vadd.xlane.f32.xlu0 %v1163
        %v1165 = vpop.xlane.xlu0 %1164
        %v1166 = vmul.f32 %v386, %v1165
        %v1167 = vmul.f32 %v388, %v1165
        %v1169 = vrot.slane %v1167, 1
        %v1171 = vadd.f32 %v1166, %v1169
        %v1172 = vadd.f32 %v1171, %v394
        %v1173 = vld [vmem:[#allocation2 + $0x2] sm:$0x3f]
        %1174 = vrot.lane.b32.xlu0 %v783, 1
        %v1175 = vpop.permute.xlu0 %1174
        %v1176 = vrot.slane %v1175, 6
        %v1177 = vsel %vm977, %v1176, %v1175
        %v1179 = vmul.f32 %v1173, %v1177
        %1181 = vset.pattern.permute.xlu0 0
        %1182 = vperm.xlu0 %1181, %v1172
        %v1183 = vpop.permute.xlu0 %1182
        %v1185 = vmul.f32 %v362, %v1183
        %v1186 = vadd.f32 %v1185, %v363
        %v1187 = vsel %vm403, %v1186, -inf
        %1188 = vmax.xlane.f32.xlu0 %v1187
        %v1189 = vpop.xlane.xlu0 %1188
        %v1190 = vsub.f32 %v1186, %v1189
        %v1191 = vmul.f32 %v1190, 1.442695
        %v1192 = vpow.pop %v1191
        %v1193 = vsel %vm403, %v1192, 0.0
        %1194 = vadd.xlane.f32.xlu0 %v1193
        %v1195 = vpop.xlane.xlu0 %1194
        %v1196 = vrcp.pop %v1195
        %v1197 = vmul.f32 %v1195, %v1196
        %v1198 = vsub.f32 1.0, %v1197
        %v1199 = vmul.f32 %v1196, %v1198
        %v1200 = vadd.f32 %v1196, %v1199
        %vm1201 = vweird.f32 %v1195
        %vm1202 = vweird.f32 %v1196
        %vm1203 = vmor %vm1201, %vm1202
        %v1204 = vsel %vm1203, %v1196, %v1200
        %v1205 = vand.u32 2147483647, %v1195
        %vm1206 = vcmp.eq.f32.partialorder %v1205, 8.507059e+37
        %v1207 = vand.u32 %v1195, 2147483648
        %v1208 = vor.u32 1.1754944e-38, %v1207
        %v1209 = vsel %vm1206, %v1208, %v1204
        %v1210 = vmul.f32 %v1192, %v1209
        %v1211 = vrot.slane %v364, 5
        %v1213 = vmul.f32 %v1210, %v1211
        %v1214 = vsel %vm403, %v1213, 0.0
        %1215 = vadd.xlane.f32.xlu0 %v1214
        %v1216 = vpop.xlane.xlu0 %1215
        %v1217 = vmul.f32 %v432, %v1216
        %v1219 = vperm.slane %v1179, 0
        %v1220 = vperm.slane %v1179, 2
        %v1221 = vperm.slane %v1179, 4
        %1222 = vrot.lane.b32.xlu0 %v1219, 127
        %v1223 = vpop.permute.xlu0 %1222
        %1224 = vrot.lane.b32.xlu0 %v1220, 127
        %v1225 = vpop.permute.xlu0 %1224
        %1226 = vrot.lane.b32.xlu0 %v1221, 127
        %v1227 = vpop.permute.xlu0 %1226
        %v1228 = vsel %vm925, %v1223, %v1225
        %v1229 = vsel %vm925, %v1225, %v1227
        %v1232 = vmul.f32 %v1217, %v1228
        %v1233 = vmul.f32 %v1217, %v1229
        %v1234 = vadd.f32 %v1155, %v1232
        %v1235 = vadd.f32 %v1156, %v1233
        %v1236 = vrot.slane %v1183, 7
        %v1238 = vmul.f32 %v362, %v1236
        %v1239 = vadd.f32 %v1238, %v363
        %v1240 = vsel %vm438, %v1239, -inf
        %1241 = vmax.xlane.f32.xlu0 %v1240
        %v1242 = vpop.xlane.xlu0 %1241
        %v1243 = vsub.f32 %v1239, %v1242
        %v1244 = vmul.f32 %v1243, 1.442695
        %v1245 = vpow.pop %v1244
        %v1246 = vsel %vm438, %v1245, 0.0
        %1247 = vadd.xlane.f32.xlu0 %v1246
        %v1248 = vpop.xlane.xlu0 %1247
        %v1249 = vrcp.pop %v1248
        %v1250 = vmul.f32 %v1248, %v1249
        %v1251 = vsub.f32 1.0, %v1250
        %v1252 = vmul.f32 %v1249, %v1251
        %v1253 = vadd.f32 %v1249, %v1252
        %vm1254 = vweird.f32 %v1248
        %vm1255 = vweird.f32 %v1249
        %vm1256 = vmor %vm1254, %vm1255
        %v1257 = vsel %vm1256, %v1249, %v1253
        %v1258 = vand.u32 2147483647, %v1248
        %vm1259 = vcmp.eq.f32.partialorder %v1258, 8.507059e+37
        %v1260 = vand.u32 %v1248, 2147483648
        %v1261 = vor.u32 1.1754944e-38, %v1260
        %v1262 = vsel %vm1259, %v1261, %v1257
        %v1263 = vmul.f32 %v1245, %v1262
        %v1264 = vrot.slane %v365, 5
        %v1266 = vmul.f32 %v1263, %v1264
        %v1267 = vsel %vm438, %v1266, 0.0
        %1268 = vadd.xlane.f32.xlu0 %v1267
        %v1269 = vpop.xlane.xlu0 %1268
        %v1270 = vmul.f32 %v467, %v1269
        %v1271 = vperm.slane %v1179, 1
        %v1272 = vperm.slane %v1179, 3
        %v1273 = vperm.slane %v1179, 5
        %1274 = vrot.lane.b32.xlu0 %v1271, 127
        %v1275 = vpop.permute.xlu0 %1274
        %1276 = vrot.lane.b32.xlu0 %v1272, 127
        %v1277 = vpop.permute.xlu0 %1276
        %1278 = vrot.lane.b32.xlu0 %v1273, 127
        %v1279 = vpop.permute.xlu0 %1278
        %v1280 = vsel %vm925, %v1275, %v1277
        %v1281 = vsel %vm925, %v1277, %v1279
        %v1284 = vmul.f32 %v1270, %v1280
        %v1285 = vmul.f32 %v1270, %v1281
        %v1288 = vrot.slane %v1284, 1
        %v1289 = vrot.slane %v1285, 1
        %v1292 = vadd.f32 %v1234, %v1288
        %v1293 = vadd.f32 %v1235, %v1289
        %v1294 = vperm.slane %v368, 6
        %v1295 = vperm.slane %v369, 6
        %v1296 = vmul.f32 %v347, %v1294
        %v1297 = vmul.f32 %v348, %v1295
        %v1298 = vsel %vm353, %v1296, 0.0
        %v1299 = vsel %vm353, %v1297, 0.0
        %v1300 = vadd.f32 %v1298, %v1299
        %1301 = vadd.xlane.f32.xlu0 %v1300
        %v1302 = vpop.xlane.xlu0 %1301
        %v1303 = vmul.f32 %v386, %v1302
        %v1304 = vmul.f32 %v388, %v1302
        %v1306 = vrot.slane %v1304, 1
        %v1308 = vadd.f32 %v1303, %v1306
        %v1309 = vadd.f32 %v1308, %v394
        %1310 = vrot.lane.b32.xlu0 %v506, 15
        %v1311 = vpop.permute.xlu0 %1310
        %v1312 = vrot.slane %v1311, 6
        %v1313 = vsel %vm839, %v1312, %v1311
        %v1315 = vmul.f32 %v1173, %v1313
        %1317 = vset.pattern.permute.xlu0 0
        %1318 = vperm.xlu0 %1317, %v1309
        %v1319 = vpop.permute.xlu0 %1318
        %v1321 = vmul.f32 %v362, %v1319
        %v1322 = vadd.f32 %v1321, %v363
        %v1323 = vsel %vm403, %v1322, -inf
        %1324 = vmax.xlane.f32.xlu0 %v1323
        %v1325 = vpop.xlane.xlu0 %1324
        %v1326 = vsub.f32 %v1322, %v1325
        %v1327 = vmul.f32 %v1326, 1.442695
        %v1328 = vpow.pop %v1327
        %v1329 = vsel %vm403, %v1328, 0.0
        %1330 = vadd.xlane.f32.xlu0 %v1329
        %v1331 = vpop.xlane.xlu0 %1330
        %v1332 = vrcp.pop %v1331
        %v1333 = vmul.f32 %v1331, %v1332
        %v1334 = vsub.f32 1.0, %v1333
        %v1335 = vmul.f32 %v1332, %v1334
        %v1336 = vadd.f32 %v1332, %v1335
        %vm1337 = vweird.f32 %v1331
        %vm1338 = vweird.f32 %v1332
        %vm1339 = vmor %vm1337, %vm1338
        %v1340 = vsel %vm1339, %v1332, %v1336
        %v1341 = vand.u32 2147483647, %v1331
        %vm1342 = vcmp.eq.f32.partialorder %v1341, 8.507059e+37
        %v1343 = vand.u32 %v1331, 2147483648
        %v1344 = vor.u32 1.1754944e-38, %v1343
        %v1345 = vsel %vm1342, %v1344, %v1340
        %v1346 = vmul.f32 %v1328, %v1345
        %v1347 = vrot.slane %v364, 6
        %v1349 = vmul.f32 %v1346, %v1347
        %v1350 = vsel %vm403, %v1349, 0.0
        %1351 = vadd.xlane.f32.xlu0 %v1350
        %v1352 = vpop.xlane.xlu0 %1351
        %v1353 = vmul.f32 %v432, %v1352
        %v1355 = vperm.slane %v1315, 0
        %v1356 = vperm.slane %v1315, 2
        %v1357 = vperm.slane %v1315, 4
        %1358 = vrot.lane.b32.xlu0 %v1355, 113
        %v1359 = vpop.permute.xlu0 %1358
        %1360 = vrot.lane.b32.xlu0 %v1356, 113
        %v1361 = vpop.permute.xlu0 %1360
        %1362 = vrot.lane.b32.xlu0 %v1357, 113
        %v1363 = vpop.permute.xlu0 %1362
        %v1364 = vsel %vm787, %v1359, %v1361
        %v1365 = vsel %vm787, %v1361, %v1363
        %v1368 = vmul.f32 %v1353, %v1364
        %v1369 = vmul.f32 %v1353, %v1365
        %v1370 = vadd.f32 %v1292, %v1368
        %v1371 = vadd.f32 %v1293, %v1369
        %v1372 = vrot.slane %v1319, 7
        %v1374 = vmul.f32 %v362, %v1372
        %v1375 = vadd.f32 %v1374, %v363
        %v1376 = vsel %vm438, %v1375, -inf
        %1377 = vmax.xlane.f32.xlu0 %v1376
        %v1378 = vpop.xlane.xlu0 %1377
        %v1379 = vsub.f32 %v1375, %v1378
        %v1380 = vmul.f32 %v1379, 1.442695
        %v1381 = vpow.pop %v1380
        %v1382 = vsel %vm438, %v1381, 0.0
        %1383 = vadd.xlane.f32.xlu0 %v1382
        %v1384 = vpop.xlane.xlu0 %1383
        %v1385 = vrcp.pop %v1384
        %v1386 = vmul.f32 %v1384, %v1385
        %v1387 = vsub.f32 1.0, %v1386
        %v1388 = vmul.f32 %v1385, %v1387
        %v1389 = vadd.f32 %v1385, %v1388
        %vm1390 = vweird.f32 %v1384
        %vm1391 = vweird.f32 %v1385
        %vm1392 = vmor %vm1390, %vm1391
        %v1393 = vsel %vm1392, %v1385, %v1389
        %v1394 = vand.u32 2147483647, %v1384
        %vm1395 = vcmp.eq.f32.partialorder %v1394, 8.507059e+37
        %v1396 = vand.u32 %v1384, 2147483648
        %v1397 = vor.u32 1.1754944e-38, %v1396
        %v1398 = vsel %vm1395, %v1397, %v1393
        %v1399 = vmul.f32 %v1381, %v1398
        %v1400 = vrot.slane %v365, 6
        %v1402 = vmul.f32 %v1399, %v1400
        %v1403 = vsel %vm438, %v1402, 0.0
        %1404 = vadd.xlane.f32.xlu0 %v1403
        %v1405 = vpop.xlane.xlu0 %1404
        %v1406 = vmul.f32 %v467, %v1405
        %v1407 = vperm.slane %v1315, 1
        %v1408 = vperm.slane %v1315, 3
        %v1409 = vperm.slane %v1315, 5
        %1410 = vrot.lane.b32.xlu0 %v1407, 113
        %v1411 = vpop.permute.xlu0 %1410
        %1412 = vrot.lane.b32.xlu0 %v1408, 113
        %v1413 = vpop.permute.xlu0 %1412
        %1414 = vrot.lane.b32.xlu0 %v1409, 113
        %v1415 = vpop.permute.xlu0 %1414
        %v1416 = vsel %vm787, %v1411, %v1413
        %v1417 = vsel %vm787, %v1413, %v1415
        %v1420 = vmul.f32 %v1406, %v1416
        %v1421 = vmul.f32 %v1406, %v1417
        %v1424 = vrot.slane %v1420, 1
        %v1425 = vrot.slane %v1421, 1
        %v1428 = vadd.f32 %v1370, %v1424
        %v1429 = vadd.f32 %v1371, %v1425
        %v1430 = vperm.slane %v368, 7
        %v1431 = vperm.slane %v369, 7
        %v1432 = vmul.f32 %v347, %v1430
        %v1433 = vmul.f32 %v348, %v1431
        %v1434 = vsel %vm353, %v1432, 0.0
        %v1435 = vsel %vm353, %v1433, 0.0
        %v1436 = vadd.f32 %v1434, %v1435
        %1437 = vadd.xlane.f32.xlu0 %v1436
        %v1438 = vpop.xlane.xlu0 %1437
        %v1439 = vmul.f32 %v386, %v1438
        %v1440 = vmul.f32 %v388, %v1438
        %v1442 = vrot.slane %v1440, 1
        %v1444 = vadd.f32 %v1439, %v1442
        %v1445 = vadd.f32 %v1444, %v394
        %1447 = vset.pattern.permute.xlu0 0
        %1448 = vperm.xlu0 %1447, %v1445
        %v1449 = vpop.permute.xlu0 %1448
        %v1451 = vmul.f32 %v362, %v1449
        %v1452 = vadd.f32 %v1451, %v363
        %v1453 = vsel %vm403, %v1452, -inf
        %1454 = vmax.xlane.f32.xlu0 %v1453
        %v1455 = vpop.xlane.xlu0 %1454
        %v1456 = vsub.f32 %v1452, %v1455
        %v1457 = vmul.f32 %v1456, 1.442695
        %v1458 = vpow.pop %v1457
        %v1459 = vsel %vm403, %v1458, 0.0
        %1460 = vadd.xlane.f32.xlu0 %v1459
        %v1461 = vpop.xlane.xlu0 %1460
        %v1462 = vrcp.pop %v1461
        %v1463 = vmul.f32 %v1461, %v1462
        %v1464 = vsub.f32 1.0, %v1463
        %v1465 = vmul.f32 %v1462, %v1464
        %v1466 = vadd.f32 %v1462, %v1465
        %vm1467 = vweird.f32 %v1461
        %vm1468 = vweird.f32 %v1462
        %vm1469 = vmor %vm1467, %vm1468
        %v1470 = vsel %vm1469, %v1462, %v1466
        %v1471 = vand.u32 2147483647, %v1461
        %vm1472 = vcmp.eq.f32.partialorder %v1471, 8.507059e+37
        %v1473 = vand.u32 %v1461, 2147483648
        %v1474 = vor.u32 1.1754944e-38, %v1473
        %v1475 = vsel %vm1472, %v1474, %v1470
        %v1476 = vmul.f32 %v1458, %v1475
        %v1477 = vrot.slane %v364, 7
        %v1479 = vmul.f32 %v1476, %v1477
        %v1480 = vsel %vm403, %v1479, 0.0
        %1481 = vadd.xlane.f32.xlu0 %v1480
        %v1482 = vpop.xlane.xlu0 %1481
        %v1483 = vmul.f32 %v432, %v1482
        %v1485 = vperm.slane %v1173, 0
        %v1486 = vperm.slane %v1173, 2
        %v1487 = vperm.slane %v1173, 4
        %1488 = vrot.lane.b32.xlu0 %v1485, 112
        %v1489 = vpop.permute.xlu0 %1488
        %1490 = vrot.lane.b32.xlu0 %v1486, 112
        %v1491 = vpop.permute.xlu0 %1490
        %1492 = vrot.lane.b32.xlu0 %v1487, 112
        %v1493 = vpop.permute.xlu0 %1492
        %vm1494 = vcmask 916480
        %v1495 = vsel %vm1494, %v1489, %v1491
        %v1496 = vsel %vm1494, %v1491, %v1493
        %v1499 = vmul.f32 %v1483, %v1495
        %v1500 = vmul.f32 %v1483, %v1496
        %v1501 = vadd.f32 %v1428, %v1499
        %v1502 = vadd.f32 %v1429, %v1500
        %v1503 = vrot.slane %v1449, 7
        %v1505 = vmul.f32 %v362, %v1503
        %v1506 = vadd.f32 %v1505, %v363
        %v1507 = vsel %vm438, %v1506, -inf
        %1508 = vmax.xlane.f32.xlu0 %v1507
        %v1509 = vpop.xlane.xlu0 %1508
        %v1510 = vsub.f32 %v1506, %v1509
        %v1511 = vmul.f32 %v1510, 1.442695
        %v1512 = vpow.pop %v1511
        %v1513 = vsel %vm438, %v1512, 0.0
        %1514 = vadd.xlane.f32.xlu0 %v1513
        %v1515 = vpop.xlane.xlu0 %1514
        %v1516 = vrcp.pop %v1515
        %v1517 = vmul.f32 %v1515, %v1516
        %v1518 = vsub.f32 1.0, %v1517
        %v1519 = vmul.f32 %v1516, %v1518
        %v1520 = vadd.f32 %v1516, %v1519
        %vm1521 = vweird.f32 %v1515
        %vm1522 = vweird.f32 %v1516
        %vm1523 = vmor %vm1521, %vm1522
        %v1524 = vsel %vm1523, %v1516, %v1520
        %v1525 = vand.u32 2147483647, %v1515
        %vm1526 = vcmp.eq.f32.partialorder %v1525, 8.507059e+37
        %v1527 = vand.u32 %v1515, 2147483648
        %v1528 = vor.u32 1.1754944e-38, %v1527
        %v1529 = vsel %vm1526, %v1528, %v1524
        %v1530 = vmul.f32 %v1512, %v1529
        %v1532 = vrot.slane %v366, 7
        %v1534 = vmul.f32 %v1530, %v1532
        %v1535 = vsel %vm438, %v1534, 0.0
        %1536 = vadd.xlane.f32.xlu0 %v1535
        %v1537 = vpop.xlane.xlu0 %1536
        %v1538 = vmul.f32 %v467, %v1537
        %v1539 = vperm.slane %v1173, 1
        %v1540 = vperm.slane %v1173, 3
        %v1541 = vperm.slane %v1173, 5
        %1542 = vrot.lane.b32.xlu0 %v1539, 112
        %v1543 = vpop.permute.xlu0 %1542
        %1544 = vrot.lane.b32.xlu0 %v1540, 112
        %v1545 = vpop.permute.xlu0 %1544
        %1546 = vrot.lane.b32.xlu0 %v1541, 112
        %v1547 = vpop.permute.xlu0 %1546
        %v1548 = vsel %vm1494, %v1543, %v1545
        %v1549 = vsel %vm1494, %v1545, %v1547
        %v1552 = vmul.f32 %v1538, %v1548
        %v1553 = vmul.f32 %v1538, %v1549
        %v1556 = vrot.slane %v1552, 1
        %v1557 = vrot.slane %v1553, 1
        %v1560 = vadd.f32 %v1501, %v1556
        %v1561 = vadd.f32 %v1502, %v1557
        %v1562 = vperm.slane %v370, 0
        %v1563 = vperm.slane %v371, 0
        %v1564 = vmul.f32 %v347, %v1562
        %v1565 = vmul.f32 %v348, %v1563
        %v1566 = vsel %vm353, %v1564, 0.0
        %v1567 = vsel %vm353, %v1565, 0.0
        %v1568 = vadd.f32 %v1566, %v1567
        %1569 = vadd.xlane.f32.xlu0 %v1568
        %v1570 = vpop.xlane.xlu0 %1569
        %v1571 = vmul.f32 %v386, %v1570
        %v1572 = vmul.f32 %v388, %v1570
        %v1574 = vrot.slane %v1572, 1
        %v1576 = vadd.f32 %v1571, %v1574
        %v1577 = vadd.f32 %v1576, %v394
        %1578 = vrot.lane.b32.xlu0 %v783, 17
        %v1579 = vpop.permute.xlu0 %1578
        %v1580 = vrot.slane %v1579, 6
        %v1581 = vsel %vm560, %v1580, %v1579
        %v1583 = vmul.f32 %v1173, %v1581
        %1585 = vset.pattern.permute.xlu0 0
        %1586 = vperm.xlu0 %1585, %v1577
        %v1587 = vpop.permute.xlu0 %1586
        %v1589 = vmul.f32 %v362, %v1587
        %v1590 = vadd.f32 %v1589, %v363
        %v1591 = vsel %vm403, %v1590, -inf
        %1592 = vmax.xlane.f32.xlu0 %v1591
        %v1593 = vpop.xlane.xlu0 %1592
        %v1594 = vsub.f32 %v1590, %v1593
        %v1595 = vmul.f32 %v1594, 1.442695
        %v1596 = vpow.pop %v1595
        %v1597 = vsel %vm403, %v1596, 0.0
        %1598 = vadd.xlane.f32.xlu0 %v1597
        %v1599 = vpop.xlane.xlu0 %1598
        %v1600 = vrcp.pop %v1599
        %v1601 = vmul.f32 %v1599, %v1600
        %v1602 = vsub.f32 1.0, %v1601
        %v1603 = vmul.f32 %v1600, %v1602
        %v1604 = vadd.f32 %v1600, %v1603
        %vm1605 = vweird.f32 %v1599
        %vm1606 = vweird.f32 %v1600
        %vm1607 = vmor %vm1605, %vm1606
        %v1608 = vsel %vm1607, %v1600, %v1604
        %v1609 = vand.u32 2147483647, %v1599
        %vm1610 = vcmp.eq.f32.partialorder %v1609, 8.507059e+37
        %v1611 = vand.u32 %v1599, 2147483648
        %v1612 = vor.u32 1.1754944e-38, %v1611
        %v1613 = vsel %vm1610, %v1612, %v1608
        %v1614 = vmul.f32 %v1596, %v1613
        %v1615 = vmul.f32 %v1614, %v365
        %v1616 = vsel %vm403, %v1615, 0.0
        %1617 = vadd.xlane.f32.xlu0 %v1616
        %v1618 = vpop.xlane.xlu0 %1617
        %v1619 = vmul.f32 %v432, %v1618
        %v1621 = vperm.slane %v1583, 0
        %v1622 = vperm.slane %v1583, 2
        %v1623 = vperm.slane %v1583, 4
        %1624 = vrot.lane.b32.xlu0 %v1621, 111
        %v1625 = vpop.permute.xlu0 %1624
        %1626 = vrot.lane.b32.xlu0 %v1622, 111
        %v1627 = vpop.permute.xlu0 %1626
        %1628 = vrot.lane.b32.xlu0 %v1623, 111
        %v1629 = vpop.permute.xlu0 %1628
        %v1630 = vsel %vm510, %v1625, %v1627
        %v1631 = vsel %vm510, %v1627, %v1629
        %v1634 = vmul.f32 %v1619, %v1630
        %v1635 = vmul.f32 %v1619, %v1631
        %v1636 = vadd.f32 %v1560, %v1634
        %v1637 = vadd.f32 %v1561, %v1635
        %v1638 = vrot.slane %v1587, 7
        %v1640 = vmul.f32 %v362, %v1638
        %v1641 = vadd.f32 %v1640, %v363
        %v1642 = vsel %vm438, %v1641, -inf
        %1643 = vmax.xlane.f32.xlu0 %v1642
        %v1644 = vpop.xlane.xlu0 %1643
        %v1645 = vsub.f32 %v1641, %v1644
        %v1646 = vmul.f32 %v1645, 1.442695
        %v1647 = vpow.pop %v1646
        %v1648 = vsel %vm438, %v1647, 0.0
        %1649 = vadd.xlane.f32.xlu0 %v1648
        %v1650 = vpop.xlane.xlu0 %1649
        %v1651 = vrcp.pop %v1650
        %v1652 = vmul.f32 %v1650, %v1651
        %v1653 = vsub.f32 1.0, %v1652
        %v1654 = vmul.f32 %v1651, %v1653
        %v1655 = vadd.f32 %v1651, %v1654
        %vm1656 = vweird.f32 %v1650
        %vm1657 = vweird.f32 %v1651
        %vm1658 = vmor %vm1656, %vm1657
        %v1659 = vsel %vm1658, %v1651, %v1655
        %v1660 = vand.u32 2147483647, %v1650
        %vm1661 = vcmp.eq.f32.partialorder %v1660, 8.507059e+37
        %v1662 = vand.u32 %v1650, 2147483648
        %v1663 = vor.u32 1.1754944e-38, %v1662
        %v1664 = vsel %vm1661, %v1663, %v1659
        %v1665 = vmul.f32 %v1647, %v1664
        %v1666 = vmul.f32 %v1665, %v366
        %v1667 = vsel %vm438, %v1666, 0.0
        %1668 = vadd.xlane.f32.xlu0 %v1667
        %v1669 = vpop.xlane.xlu0 %1668
        %v1670 = vmul.f32 %v467, %v1669
        %v1671 = vperm.slane %v1583, 1
        %v1672 = vperm.slane %v1583, 3
        %v1673 = vperm.slane %v1583, 5
        %1674 = vrot.lane.b32.xlu0 %v1671, 111
        %v1675 = vpop.permute.xlu0 %1674
        %1676 = vrot.lane.b32.xlu0 %v1672, 111
        %v1677 = vpop.permute.xlu0 %1676
        %1678 = vrot.lane.b32.xlu0 %v1673, 111
        %v1679 = vpop.permute.xlu0 %1678
        %v1680 = vsel %vm510, %v1675, %v1677
        %v1681 = vsel %vm510, %v1677, %v1679
        %v1684 = vmul.f32 %v1670, %v1680
        %v1685 = vmul.f32 %v1670, %v1681
        %v1688 = vrot.slane %v1684, 1
        %v1689 = vrot.slane %v1685, 1
        %v1692 = vadd.f32 %v1636, %v1688
        %v1693 = vadd.f32 %v1637, %v1689
        %v1694 = vxor.u32 %v1692, 2147483648
        %v1695 = vxor.u32 %v1693, 2147483648
        %v1696 = vmul.f32 %v1694, 1.442695
        %v1697 = vpow.pop %v1696
        %v1698 = vmul.f32 %v1695, 1.442695
        %v1699 = vpow.pop %v1698
        %v1700 = vadd.f32 %v1697, 1.0
        %v1701 = vadd.f32 %v1699, 1.0
        %v1702 = vrcp.pop %v1700
        %v1703 = vmul.f32 %v1700, %v1702
        %v1704 = vsub.f32 1.0, %v1703
        %v1705 = vmul.f32 %v1702, %v1704
        %v1706 = vadd.f32 %v1702, %v1705
        %vm1707 = vweird.f32 %v1700
        %vm1708 = vweird.f32 %v1702
        %vm1709 = vmor %vm1707, %vm1708
        %v1710 = vsel %vm1709, %v1702, %v1706
        %v1711 = vand.u32 2147483647, %v1700
        %vm1712 = vcmp.eq.f32.partialorder %v1711, 8.507059e+37
        %v1713 = vand.u32 %v1700, 2147483648
        %v1714 = vor.u32 1.1754944e-38, %v1713
        %v1715 = vsel %vm1712, %v1714, %v1710
        %v1716 = vmul.f32 1.0, %v1715
        %v1717 = vrcp.pop %v1701
        %v1718 = vmul.f32 %v1701, %v1717
        %v1719 = vsub.f32 1.0, %v1718
        %v1720 = vmul.f32 %v1717, %v1719
        %v1721 = vadd.f32 %v1717, %v1720
        %vm1722 = vweird.f32 %v1701
        %vm1723 = vweird.f32 %v1717
        %vm1724 = vmor %vm1722, %vm1723
        %v1725 = vsel %vm1724, %v1717, %v1721
        %v1726 = vand.u32 2147483647, %v1701
        %vm1727 = vcmp.eq.f32.partialorder %v1726, 8.507059e+37
        %v1728 = vand.u32 %v1701, 2147483648
        %v1729 = vor.u32 1.1754944e-38, %v1728
        %v1730 = vsel %vm1727, %v1729, %v1725
        %v1731 = vmul.f32 1.0, %v1730
        %v1732 = vmul.f32 %v1692, %v1716
        %v1733 = vmul.f32 %v1693, %v1731
        %v1736 = vrot.slane %v1733, 7
        %v1737 = vsel %vm346, %v1732, %v1736
        %v1739 = vlaneseq
        %vm1740 = vcmp.ge.s32.totalorder %v1739, 0
        %vm1741 = vcmp.lt.s32.totalorder %v1739, 256
        %vm1742 = vmand %vm1740, %vm1741
        %1743 = vst.msk [vmem:[%s317] sm:$0x3] %vm1742, %v1737
        %p1744 = scmp.lt.s32.totalorder %s20, 1
        %s1745 = scalar_select %p1744, %s20, 1
        %s1746 = smul.addr %s1745, 2
        %s1747 = scalar_lea.vmem %s8, %s1746
        // Predicated region
        $region57: #{spatial_attention.1} parent=51 // pred_check
          %p1748 = pneg %p211
        $region58: #{spatial_attention.1} parent=51 // pred_check_branch
          %1750 = sbr.rel (%p1748) target = $region60
        $region59: #{spatial_attention.1} parent=51 // pred_region
          _
        $region60: #{spatial_attention.1} parent=51 // pred_fallthru
          _
      $region52: #{spatial_attention.1} parent=5 // pred_fallthru
        _
      %p1751 = scmp.le.s32.totalorder 2, %s15
      // Predicated region
      $region61: #{spatial_attention.1} parent=5 // pred_check
        %p1752 = pneg %p1751
      $region62: #{spatial_attention.1} parent=5 // pred_check_branch
        %1754 = sbr.rel (%p1752) target = $region64
      $region63: #{spatial_attention.1} parent=5 // pred_region
        %s1755 = ssub.s32 %s15, 2
        // Predicated region
        $region65: #{spatial_attention.1} parent=63 // pred_check
          %p1756 = pneg %p217
        $region66: #{spatial_attention.1} parent=63 // pred_check_branch
          %1758 = sbr.rel (%p1756) target = $region68
        $region67: #{spatial_attention.1} parent=63 // pred_region
          %p1759 = scmp.lt.s32.totalorder %s21, 1
          %s1760 = scalar_select %p1759, %s21, 1
          %s1761 = smul.addr %s1760, 2
          %s1762 = scalar_lea.vmem %s8, %s1761
        $region68: #{spatial_attention.1} parent=63 // pred_fallthru
          _
      $region64: #{spatial_attention.1} parent=5 // pred_fallthru
        _
    $region6: #{spatial_attention.1} parent=1 // loop_footer
      %s19 = sadd.s32 1, %s15
    $region7: #{spatial_attention.1} parent=1 // loop_footer_branch
      %14 = sbr.rel target = $region3
    $region8: #{spatial_attention.1} parent=1 // loop_exit
      _
    %1763 = vsyncpa [#allocation4], 1
    %s1764 = scalar_lea.sflag [#allocation4], 1
    %1765 = vsyncpa %s1764, 1

</llo_original>
